<compile_context>
chip_gen: v5e
topology: v5e:2x2
jax: 0.10.0
libtpu: 0.0.40
codegen_flags: <defaults>
</compile_context>

<pallas_src>
import jax
import jax.numpy as jnp
import numpy as np
from jax import lax
from jax.experimental import pallas as pl
from jax.experimental.pallas import tpu as pltpu

INPUT_DIM = 2
HIDDEN_DIM = 64
NUM_LAYERS = 2
OUTPUT_DIM = 2
OUT_PAD = 128            # lane-dense padded output width (zero-padded cols 2..127)


# ----------------------------------------------------------------------------- kernel
def lstm_mlp_kernel(gx_ref,                      # (T, NB, 4H)  x @ W_ih0 + b0 (hoisted)
                    whh0_ref,                    # (H, 4H)
                    wl1_ref, b1_ref,             # layer-1 stacked: (2H, 4H), (1, 4H)
                    w1_ref, bf1_ref,             # fc: H   -> 128
                    w2_ref, bf2_ref,             # fc: 128 -> 64
                    w3_ref, bf3_ref,             # fc: 64  -> OUT_PAD (zero-padded cols)
                    out_ref):                    # (NB, OUT_PAD)
    T, NB, _ = gx_ref.shape
    H = HIDDEN_DIM

    whh0 = whh0_ref[...]                         # (H, 4H)   loaded once
    wl1 = wl1_ref[...]                           # (2H, 4H)  = [W_ih1; W_hh1]

    def cell(g, c):
        # PyTorch gate order [i, f, g, o]; 64-lane slices of the 256-wide gate row.
        i_g = jax.nn.sigmoid(g[:, 0 * H:1 * H])
        f_g = jax.nn.sigmoid(g[:, 1 * H:2 * H])
        g_g = jnp.tanh(g[:, 2 * H:3 * H])
        o_g = jax.nn.sigmoid(g[:, 3 * H:4 * H])
        c_new = f_g * c + i_g * g_g
        h_new = o_g * jnp.tanh(c_new)
        return h_new, c_new

    def step(t, carry):
        h0, c0, h1, c1 = carry
        # layer 0: only the h-path matmul stays on the serial critical path.
        g0 = jnp.dot(h0, whh0, preferred_element_type=jnp.float32) + gx_ref[t]
        h0, c0 = cell(g0, c0)
        # layer 1: fused input/hidden matmul, K = 2H = 128 (lane-aligned LHS).
        lhs = jnp.concatenate([h0, h1], axis=1)                  # (NB, 2H)
        g1 = jnp.dot(lhs, wl1, preferred_element_type=jnp.float32) + b1_ref[...]
        h1, c1 = cell(g1, c1)
        return (h0, c0, h1, c1)

    zeros = jnp.zeros((NB, H), jnp.float32)
    _, _, h1, _ = lax.fori_loop(0, T, step, (zeros, zeros, zeros, zeros), unroll=True)

    # ---- MLP head on the final top-layer hidden state.
    z = jnp.maximum(
        jnp.dot(h1, w1_ref[...], preferred_element_type=jnp.float32) + bf1_ref[...], 0.0)
    z = jnp.maximum(
        jnp.dot(z, w2_ref[...], preferred_element_type=jnp.float32) + bf2_ref[...], 0.0)
    out_ref[...] = (
        jnp.dot(z, w3_ref[...], preferred_element_type=jnp.float32) + bf3_ref[...])


# ----------------------------------------------------------------------------- params
def init_params(key):
    """Deterministic parameter init, PyTorch-like uniform(-1/sqrt(fan), 1/sqrt(fan))."""
    H = HIDDEN_DIM

    def unif(key, shape, fan):
        bound = 1.0 / np.sqrt(fan)
        return jax.random.uniform(key, shape, jnp.float32, -bound, bound)

    keys = jax.random.split(key, 14)
    p = {}
    # LSTM layer 0: weights stored pre-transposed ((in, 4H)), biases (1, 4H) = b_ih + b_hh
    p["wih0_t"] = unif(keys[0], (INPUT_DIM, 4 * H), H)
    p["whh0_t"] = unif(keys[1], (H, 4 * H), H)
    p["b0"] = (unif(keys[2], (1, 4 * H), H) + unif(keys[3], (1, 4 * H), H))
    # LSTM layer 1
    p["wih1_t"] = unif(keys[4], (H, 4 * H), H)
    p["whh1_t"] = unif(keys[5], (H, 4 * H), H)
    p["b1"] = (unif(keys[6], (1, 4 * H), H) + unif(keys[7], (1, 4 * H), H))
    # fc head
    p["w1_t"] = unif(keys[8], (H, 128), H)
    p["bf1"] = unif(keys[9], (1, 128), H)
    p["w2_t"] = unif(keys[10], (128, 64), 128)
    p["bf2"] = unif(keys[11], (1, 64), 128)
    p["w3_t"] = unif(keys[12], (64, OUTPUT_DIM), 64)
    p["bf3"] = unif(keys[13], (1, OUTPUT_DIM), 64)
    return p


def pack_params(p):
    """Kernel-side weights: natural 4H=256 gate width; layer-1 input/hidden weights
    stacked; final layer zero-padded to OUT_PAD columns for a lane-dense output."""
    kp = {}
    kp["wih0"] = p["wih0_t"]                                      # (D, 4H)   (wrapper-side)
    kp["b0"] = p["b0"]                                            # (1, 4H)   (wrapper-side)
    kp["whh0"] = p["whh0_t"]                                      # (H, 4H)
    kp["wl1"] = jnp.concatenate([p["wih1_t"], p["whh1_t"]], 0)    # (2H, 4H)
    kp["b1"] = p["b1"]                                            # (1, 4H)
    kp["w1"] = p["w1_t"]                                          # (H, 128)
    kp["bf1"] = p["bf1"]                                          # (1, 128)
    kp["w2"] = p["w2_t"]                                          # (128, 64)
    kp["bf2"] = p["bf2"]                                          # (1, 64)
    kp["w3"] = jnp.pad(p["w3_t"], ((0, 0), (0, OUT_PAD - OUTPUT_DIM)))   # (64, 128)
    kp["bf3"] = jnp.pad(p["bf3"], ((0, 0), (0, OUT_PAD - OUTPUT_DIM)))   # (1, 128)
    return kp


# ----------------------------------------------------------------------------- wrapper
def population_predictor_lstm(x, params):
    """x: (time_steps, num_individuals, input_dim) -> (num_individuals, output_dim)."""
    T, N, D = x.shape
    H = HIDDEN_DIM
    G = 4 * H

    kp = pack_params(params)

    # PyTorch: x.view(num_individuals, time_steps, input_dim) — a reshape, NOT a transpose.
    x_btd = jnp.reshape(x, (N, T, D)).astype(jnp.float32)
    x_tbd = jnp.transpose(x_btd, (1, 0, 2))                        # (T, N, D)

    # Hoisted layer-0 input projection (K=2) done in the wrapper; bias folded in.
    gx = jnp.einsum("tnd,dg->tng", x_tbd, kp["wih0"]) + kp["b0"][0]   # (T, N, 4H)

    # Batch tiling: >=2 blocks whenever N > 8 (shards across both v7x TensorCores),
    # NB capped at 256 so per-block VMEM stays well inside v5e's 16 MiB scoped limit.
    if N <= 8:
        NB = 8
    else:
        NB = min(256, ((-(-N // 2) + 7) // 8) * 8)
    N_pad = ((N + NB - 1) // NB) * NB
    if N_pad != N:
        gx = jnp.pad(gx, ((0, 0), (0, N_pad - N), (0, 0)))
    num_blocks = N_pad // NB

    weights = (kp["whh0"], kp["wl1"], kp["b1"], kp["w1"], kp["bf1"],
               kp["w2"], kp["bf2"], kp["w3"], kp["bf3"])

    def const_spec(a):  # full-array block, resident across all grid steps
        return pl.BlockSpec(a.shape, lambda i, n=a.ndim: (0,) * n)

    in_specs = ([pl.BlockSpec((T, NB, G), lambda i: (0, i, 0))]
                + [const_spec(w) for w in weights])
    out_spec = pl.BlockSpec((NB, OUT_PAD), lambda i: (i, 0))

    out = pl.pallas_call(
        lstm_mlp_kernel,
        out_shape=jax.ShapeDtypeStruct((N_pad, OUT_PAD), jnp.float32),
        grid=(num_blocks,),
        in_specs=in_specs,
        out_specs=out_spec,
        compiler_params=pltpu.CompilerParams(
            dimension_semantics=("parallel",)),
    )(gx, *weights)
    return out[:N, :OUTPUT_DIM]


# ----------------------------------------------------------------------------- reference
def reference_forward(x, p):
    """Pure-JAX reference reproducing the PyTorch forward semantics."""
    T, N, D = x.shape
    H = HIDDEN_DIM
    xb = jnp.reshape(x, (N, T, D)).astype(jnp.float32)             # same as .view

    def run_layer(inp, wih_t, whh_t, b):
        def cell(carry, xt):
            h, c = carry
            g = xt @ wih_t + h @ whh_t + b[0]
            i = jax.nn.sigmoid(g[:, 0 * H:1 * H])
            f = jax.nn.sigmoid(g[:, 1 * H:2 * H])
            gg = jnp.tanh(g[:, 2 * H:3 * H])
            o = jax.nn.sigmoid(g[:, 3 * H:4 * H])
            c = f * c + i * gg
            h = o * jnp.tanh(c)
            return (h, c), h

        h0 = jnp.zeros((N, H), jnp.float32)
        c0 = jnp.zeros((N, H), jnp.float32)
        (_, _), hs = lax.scan(cell, (h0, c0), jnp.transpose(inp, (1, 0, 2)))
        return jnp.transpose(hs, (1, 0, 2))                        # (B, T, H)

    out0 = run_layer(xb, p["wih0_t"], p["whh0_t"], p["b0"])
    out1 = run_layer(out0, p["wih1_t"], p["whh1_t"], p["b1"])
    last = out1[:, -1, :]
    z = jnp.maximum(last @ p["w1_t"] + p["bf1"], 0.0)
    z = jnp.maximum(z @ p["w2_t"] + p["bf2"], 0.0)
    return z @ p["w3_t"] + p["bf3"]


if __name__ == "__main__":
    key = jax.random.PRNGKey(0)
    k_param, k_x = jax.random.split(key)

    time_steps, num_individuals = 8, 16
    x = jax.random.normal(k_x, (time_steps, num_individuals, INPUT_DIM), jnp.float32)
    params = init_params(k_param)

    out = population_predictor_lstm(x, params)
    out = jax.block_until_ready(out)

    ref = reference_forward(x, params)
    np.testing.assert_allclose(np.asarray(out), np.asarray(ref), rtol=1e-4, atol=1e-4)
    assert out.shape == (num_individuals, OUTPUT_DIM)
    print("KERNEL_OK")
</pallas_src>

<mosaic_0001>
module attributes {stable_mosaic.version = 11 : i64} {
  func.func @lstm_mlp_kernel(%arg0: i32, %arg1: memref<8x8x256xf32, #tpu.memory_space<vmem>>, %arg2: memref<64x256xf32, #tpu.memory_space<vmem>>, %arg3: memref<128x256xf32, #tpu.memory_space<vmem>>, %arg4: memref<1x256xf32, #tpu.memory_space<vmem>>, %arg5: memref<64x128xf32, #tpu.memory_space<vmem>>, %arg6: memref<1x128xf32, #tpu.memory_space<vmem>>, %arg7: memref<128x64xf32, #tpu.memory_space<vmem>>, %arg8: memref<1x64xf32, #tpu.memory_space<vmem>>, %arg9: memref<64x128xf32, #tpu.memory_space<vmem>>, %arg10: memref<1x128xf32, #tpu.memory_space<vmem>>, %arg11: memref<8x128xf32, #tpu.memory_space<vmem>>) attributes {dimension_semantics = [#tpu.dimension_semantics<parallel>], iteration_bounds = array<i64: 2>, scalar_prefetch = 0 : i64, scratch_operands = 0 : i64, tpu.core_type = #tpu.core_type<tc>, window_params = [{transform_indices = @transform_0, window_bounds = array<i64: 8, 8, 256>}, {pipeline_mode = #tpu.pipeline_mode<synchronous>, transform_indices = @transform_1, window_bounds = array<i64: 64, 256>}, {pipeline_mode = #tpu.pipeline_mode<synchronous>, transform_indices = @transform_2, window_bounds = array<i64: 128, 256>}, {pipeline_mode = #tpu.pipeline_mode<synchronous>, transform_indices = @transform_3, window_bounds = array<i64: 1, 256>}, {pipeline_mode = #tpu.pipeline_mode<synchronous>, transform_indices = @transform_4, window_bounds = array<i64: 64, 128>}, {pipeline_mode = #tpu.pipeline_mode<synchronous>, transform_indices = @transform_5, window_bounds = array<i64: 1, 128>}, {pipeline_mode = #tpu.pipeline_mode<synchronous>, transform_indices = @transform_6, window_bounds = array<i64: 128, 64>}, {pipeline_mode = #tpu.pipeline_mode<synchronous>, transform_indices = @transform_7, window_bounds = array<i64: 1, 64>}, {pipeline_mode = #tpu.pipeline_mode<synchronous>, transform_indices = @transform_8, window_bounds = array<i64: 64, 128>}, {pipeline_mode = #tpu.pipeline_mode<synchronous>, transform_indices = @transform_9, window_bounds = array<i64: 1, 128>}, {transform_indices = @transform_10, window_bounds = array<i64: 8, 128>}]} {
    %c0 = arith.constant 0 : index
    %c0_0 = arith.constant 0 : index
    %0 = vector.load %arg2[%c0, %c0_0] : memref<64x256xf32, #tpu.memory_space<vmem>>, vector<64x256xf32>
    %c0_1 = arith.constant 0 : index
    %c0_2 = arith.constant 0 : index
    %1 = vector.load %arg3[%c0_1, %c0_2] : memref<128x256xf32, #tpu.memory_space<vmem>>, vector<128x256xf32>
    %cst = arith.constant 0.000000e+00 : f32
    %2 = vector.broadcast %cst : f32 to vector<8x64xf32>
    %c0_i32 = arith.constant 0 : i32
    %cst_3 = arith.constant dense<0.000000e+00> : vector<8x256xf32>
    %3 = tpu.matmul %2, %0, %cst_3 {dimension_numbers = #tpu.dot_dimension_numbers<[1], [0], [0], [1], [0, 0, 1, 1], [], []>} : vector<8x64xf32>, vector<64x256xf32>, vector<8x256xf32> -> vector<8x256xf32>
    %4 = arith.index_cast %c0_i32 : i32 to index
    %c0_4 = arith.constant 0 : index
    %c0_5 = arith.constant 0 : index
    %5 = vector.load %arg1[%4, %c0_4, %c0_5] : memref<8x8x256xf32, #tpu.memory_space<vmem>>, vector<1x8x256xf32>
    %6 = vector.shape_cast %5 : vector<1x8x256xf32> to vector<8x256xf32>
    %7 = arith.addf %3, %6 : vector<8x256xf32>
    %8 = vector.extract_strided_slice %7 {offsets = [0, 0], sizes = [8, 64], strides = [1, 1]} : vector<8x256xf32> to vector<8x64xf32>
    %9 = arith.negf %8 : vector<8x64xf32>
    %10 = math.exp %9 : vector<8x64xf32>
    %cst_6 = arith.constant 1.000000e+00 : f32
    %11 = vector.broadcast %cst_6 : f32 to vector<8x64xf32>
    %12 = arith.addf %11, %10 : vector<8x64xf32>
    %13 = arith.divf %11, %12 : vector<8x64xf32>
    %14 = vector.extract_strided_slice %7 {offsets = [0, 64], sizes = [8, 64], strides = [1, 1]} : vector<8x256xf32> to vector<8x64xf32>
    %15 = arith.negf %14 : vector<8x64xf32>
    %16 = math.exp %15 : vector<8x64xf32>
    %cst_7 = arith.constant 1.000000e+00 : f32
    %17 = vector.broadcast %cst_7 : f32 to vector<8x64xf32>
    %18 = arith.addf %17, %16 : vector<8x64xf32>
    %19 = arith.divf %17, %18 : vector<8x64xf32>
    %20 = vector.extract_strided_slice %7 {offsets = [0, 128], sizes = [8, 64], strides = [1, 1]} : vector<8x256xf32> to vector<8x64xf32>
    %21 = math.tanh %20 : vector<8x64xf32>
    %22 = vector.extract_strided_slice %7 {offsets = [0, 192], sizes = [8, 64], strides = [1, 1]} : vector<8x256xf32> to vector<8x64xf32>
    %23 = arith.negf %22 : vector<8x64xf32>
    %24 = math.exp %23 : vector<8x64xf32>
    %cst_8 = arith.constant 1.000000e+00 : f32
    %25 = vector.broadcast %cst_8 : f32 to vector<8x64xf32>
    %26 = arith.addf %25, %24 : vector<8x64xf32>
    %27 = arith.divf %25, %26 : vector<8x64xf32>
    %28 = arith.mulf %19, %2 : vector<8x64xf32>
    %29 = arith.mulf %13, %21 : vector<8x64xf32>
    %30 = arith.addf %28, %29 : vector<8x64xf32>
    %31 = math.tanh %30 : vector<8x64xf32>
    %32 = arith.mulf %27, %31 : vector<8x64xf32>
    %33 = tpu.concatenate %32, %2 in 1 : vector<8x64xf32>, vector<8x64xf32> -> vector<8x128xf32>
    %cst_9 = arith.constant dense<0.000000e+00> : vector<8x256xf32>
    %34 = tpu.matmul %33, %1, %cst_9 {dimension_numbers = #tpu.dot_dimension_numbers<[1], [0], [0], [1], [0, 0, 1, 1], [], []>} : vector<8x128xf32>, vector<128x256xf32>, vector<8x256xf32> -> vector<8x256xf32>
    %c0_10 = arith.constant 0 : index
    %c0_11 = arith.constant 0 : index
    %35 = vector.load %arg4[%c0_10, %c0_11] : memref<1x256xf32, #tpu.memory_space<vmem>>, vector<1x256xf32>
    %36 = vector.broadcast %35 : vector<1x256xf32> to vector<8x256xf32>
    %37 = arith.addf %34, %36 : vector<8x256xf32>
    %38 = vector.extract_strided_slice %37 {offsets = [0, 0], sizes = [8, 64], strides = [1, 1]} : vector<8x256xf32> to vector<8x64xf32>
    %39 = arith.negf %38 : vector<8x64xf32>
    %40 = math.exp %39 : vector<8x64xf32>
    %cst_12 = arith.constant 1.000000e+00 : f32
    %41 = vector.broadcast %cst_12 : f32 to vector<8x64xf32>
    %42 = arith.addf %41, %40 : vector<8x64xf32>
    %43 = arith.divf %41, %42 : vector<8x64xf32>
    %44 = vector.extract_strided_slice %37 {offsets = [0, 64], sizes = [8, 64], strides = [1, 1]} : vector<8x256xf32> to vector<8x64xf32>
    %45 = arith.negf %44 : vector<8x64xf32>
    %46 = math.exp %45 : vector<8x64xf32>
    %cst_13 = arith.constant 1.000000e+00 : f32
    %47 = vector.broadcast %cst_13 : f32 to vector<8x64xf32>
    %48 = arith.addf %47, %46 : vector<8x64xf32>
    %49 = arith.divf %47, %48 : vector<8x64xf32>
    %50 = vector.extract_strided_slice %37 {offsets = [0, 128], sizes = [8, 64], strides = [1, 1]} : vector<8x256xf32> to vector<8x64xf32>
    %51 = math.tanh %50 : vector<8x64xf32>
    %52 = vector.extract_strided_slice %37 {offsets = [0, 192], sizes = [8, 64], strides = [1, 1]} : vector<8x256xf32> to vector<8x64xf32>
    %53 = arith.negf %52 : vector<8x64xf32>
    %54 = math.exp %53 : vector<8x64xf32>
    %cst_14 = arith.constant 1.000000e+00 : f32
    %55 = vector.broadcast %cst_14 : f32 to vector<8x64xf32>
    %56 = arith.addf %55, %54 : vector<8x64xf32>
    %57 = arith.divf %55, %56 : vector<8x64xf32>
    %58 = arith.mulf %49, %2 : vector<8x64xf32>
    %59 = arith.mulf %43, %51 : vector<8x64xf32>
    %60 = arith.addf %58, %59 : vector<8x64xf32>
    %61 = math.tanh %60 : vector<8x64xf32>
    %62 = arith.mulf %57, %61 : vector<8x64xf32>
    %c1_i32 = arith.constant 1 : i32
    %cst_15 = arith.constant dense<0.000000e+00> : vector<8x256xf32>
    %63 = tpu.matmul %32, %0, %cst_15 {dimension_numbers = #tpu.dot_dimension_numbers<[1], [0], [0], [1], [0, 0, 1, 1], [], []>} : vector<8x64xf32>, vector<64x256xf32>, vector<8x256xf32> -> vector<8x256xf32>
    %64 = arith.index_cast %c1_i32 : i32 to index
    %c0_16 = arith.constant 0 : index
    %c0_17 = arith.constant 0 : index
    %65 = vector.load %arg1[%64, %c0_16, %c0_17] : memref<8x8x256xf32, #tpu.memory_space<vmem>>, vector<1x8x256xf32>
    %66 = vector.shape_cast %65 : vector<1x8x256xf32> to vector<8x256xf32>
    %67 = arith.addf %63, %66 : vector<8x256xf32>
    %68 = vector.extract_strided_slice %67 {offsets = [0, 0], sizes = [8, 64], strides = [1, 1]} : vector<8x256xf32> to vector<8x64xf32>
    %69 = arith.negf %68 : vector<8x64xf32>
    %70 = math.exp %69 : vector<8x64xf32>
    %cst_18 = arith.constant 1.000000e+00 : f32
    %71 = vector.broadcast %cst_18 : f32 to vector<8x64xf32>
    %72 = arith.addf %71, %70 : vector<8x64xf32>
    %73 = arith.divf %71, %72 : vector<8x64xf32>
    %74 = vector.extract_strided_slice %67 {offsets = [0, 64], sizes = [8, 64], strides = [1, 1]} : vector<8x256xf32> to vector<8x64xf32>
    %75 = arith.negf %74 : vector<8x64xf32>
    %76 = math.exp %75 : vector<8x64xf32>
    %cst_19 = arith.constant 1.000000e+00 : f32
    %77 = vector.broadcast %cst_19 : f32 to vector<8x64xf32>
    %78 = arith.addf %77, %76 : vector<8x64xf32>
    %79 = arith.divf %77, %78 : vector<8x64xf32>
    %80 = vector.extract_strided_slice %67 {offsets = [0, 128], sizes = [8, 64], strides = [1, 1]} : vector<8x256xf32> to vector<8x64xf32>
    %81 = math.tanh %80 : vector<8x64xf32>
    %82 = vector.extract_strided_slice %67 {offsets = [0, 192], sizes = [8, 64], strides = [1, 1]} : vector<8x256xf32> to vector<8x64xf32>
    %83 = arith.negf %82 : vector<8x64xf32>
    %84 = math.exp %83 : vector<8x64xf32>
    %cst_20 = arith.constant 1.000000e+00 : f32
    %85 = vector.broadcast %cst_20 : f32 to vector<8x64xf32>
    %86 = arith.addf %85, %84 : vector<8x64xf32>
    %87 = arith.divf %85, %86 : vector<8x64xf32>
    %88 = arith.mulf %79, %30 : vector<8x64xf32>
    %89 = arith.mulf %73, %81 : vector<8x64xf32>
    %90 = arith.addf %88, %89 : vector<8x64xf32>
    %91 = math.tanh %90 : vector<8x64xf32>
    %92 = arith.mulf %87, %91 : vector<8x64xf32>
    %93 = tpu.concatenate %92, %62 in 1 : vector<8x64xf32>, vector<8x64xf32> -> vector<8x128xf32>
    %cst_21 = arith.constant dense<0.000000e+00> : vector<8x256xf32>
    %94 = tpu.matmul %93, %1, %cst_21 {dimension_numbers = #tpu.dot_dimension_numbers<[1], [0], [0], [1], [0, 0, 1, 1], [], []>} : vector<8x128xf32>, vector<128x256xf32>, vector<8x256xf32> -> vector<8x256xf32>
    %c0_22 = arith.constant 0 : index
    %c0_23 = arith.constant 0 : index
    %95 = vector.load %arg4[%c0_22, %c0_23] : memref<1x256xf32, #tpu.memory_space<vmem>>, vector<1x256xf32>
    %96 = vector.broadcast %95 : vector<1x256xf32> to vector<8x256xf32>
    %97 = arith.addf %94, %96 : vector<8x256xf32>
    %98 = vector.extract_strided_slice %97 {offsets = [0, 0], sizes = [8, 64], strides = [1, 1]} : vector<8x256xf32> to vector<8x64xf32>
    %99 = arith.negf %98 : vector<8x64xf32>
    %100 = math.exp %99 : vector<8x64xf32>
    %cst_24 = arith.constant 1.000000e+00 : f32
    %101 = vector.broadcast %cst_24 : f32 to vector<8x64xf32>
    %102 = arith.addf %101, %100 : vector<8x64xf32>
    %103 = arith.divf %101, %102 : vector<8x64xf32>
    %104 = vector.extract_strided_slice %97 {offsets = [0, 64], sizes = [8, 64], strides = [1, 1]} : vector<8x256xf32> to vector<8x64xf32>
    %105 = arith.negf %104 : vector<8x64xf32>
    %106 = math.exp %105 : vector<8x64xf32>
    %cst_25 = arith.constant 1.000000e+00 : f32
    %107 = vector.broadcast %cst_25 : f32 to vector<8x64xf32>
    %108 = arith.addf %107, %106 : vector<8x64xf32>
    %109 = arith.divf %107, %108 : vector<8x64xf32>
    %110 = vector.extract_strided_slice %97 {offsets = [0, 128], sizes = [8, 64], strides = [1, 1]} : vector<8x256xf32> to vector<8x64xf32>
    %111 = math.tanh %110 : vector<8x64xf32>
    %112 = vector.extract_strided_slice %97 {offsets = [0, 192], sizes = [8, 64], strides = [1, 1]} : vector<8x256xf32> to vector<8x64xf32>
    %113 = arith.negf %112 : vector<8x64xf32>
    %114 = math.exp %113 : vector<8x64xf32>
    %cst_26 = arith.constant 1.000000e+00 : f32
    %115 = vector.broadcast %cst_26 : f32 to vector<8x64xf32>
    %116 = arith.addf %115, %114 : vector<8x64xf32>
    %117 = arith.divf %115, %116 : vector<8x64xf32>
    %118 = arith.mulf %109, %60 : vector<8x64xf32>
    %119 = arith.mulf %103, %111 : vector<8x64xf32>
    %120 = arith.addf %118, %119 : vector<8x64xf32>
    %121 = math.tanh %120 : vector<8x64xf32>
    %122 = arith.mulf %117, %121 : vector<8x64xf32>
    %c2_i32 = arith.constant 2 : i32
    %cst_27 = arith.constant dense<0.000000e+00> : vector<8x256xf32>
    %123 = tpu.matmul %92, %0, %cst_27 {dimension_numbers = #tpu.dot_dimension_numbers<[1], [0], [0], [1], [0, 0, 1, 1], [], []>} : vector<8x64xf32>, vector<64x256xf32>, vector<8x256xf32> -> vector<8x256xf32>
    %124 = arith.index_cast %c2_i32 : i32 to index
    %c0_28 = arith.constant 0 : index
    %c0_29 = arith.constant 0 : index
    %125 = vector.load %arg1[%124, %c0_28, %c0_29] : memref<8x8x256xf32, #tpu.memory_space<vmem>>, vector<1x8x256xf32>
    %126 = vector.shape_cast %125 : vector<1x8x256xf32> to vector<8x256xf32>
    %127 = arith.addf %123, %126 : vector<8x256xf32>
    %128 = vector.extract_strided_slice %127 {offsets = [0, 0], sizes = [8, 64], strides = [1, 1]} : vector<8x256xf32> to vector<8x64xf32>
    %129 = arith.negf %128 : vector<8x64xf32>
    %130 = math.exp %129 : vector<8x64xf32>
    %cst_30 = arith.constant 1.000000e+00 : f32
    %131 = vector.broadcast %cst_30 : f32 to vector<8x64xf32>
    %132 = arith.addf %131, %130 : vector<8x64xf32>
    %133 = arith.divf %131, %132 : vector<8x64xf32>
    %134 = vector.extract_strided_slice %127 {offsets = [0, 64], sizes = [8, 64], strides = [1, 1]} : vector<8x256xf32> to vector<8x64xf32>
    %135 = arith.negf %134 : vector<8x64xf32>
    %136 = math.exp %135 : vector<8x64xf32>
    %cst_31 = arith.constant 1.000000e+00 : f32
    %137 = vector.broadcast %cst_31 : f32 to vector<8x64xf32>
    %138 = arith.addf %137, %136 : vector<8x64xf32>
    %139 = arith.divf %137, %138 : vector<8x64xf32>
    %140 = vector.extract_strided_slice %127 {offsets = [0, 128], sizes = [8, 64], strides = [1, 1]} : vector<8x256xf32> to vector<8x64xf32>
    %141 = math.tanh %140 : vector<8x64xf32>
    %142 = vector.extract_strided_slice %127 {offsets = [0, 192], sizes = [8, 64], strides = [1, 1]} : vector<8x256xf32> to vector<8x64xf32>
    %143 = arith.negf %142 : vector<8x64xf32>
    %144 = math.exp %143 : vector<8x64xf32>
    %cst_32 = arith.constant 1.000000e+00 : f32
    %145 = vector.broadcast %cst_32 : f32 to vector<8x64xf32>
    %146 = arith.addf %145, %144 : vector<8x64xf32>
    %147 = arith.divf %145, %146 : vector<8x64xf32>
    %148 = arith.mulf %139, %90 : vector<8x64xf32>
    %149 = arith.mulf %133, %141 : vector<8x64xf32>
    %150 = arith.addf %148, %149 : vector<8x64xf32>
    %151 = math.tanh %150 : vector<8x64xf32>
    %152 = arith.mulf %147, %151 : vector<8x64xf32>
    %153 = tpu.concatenate %152, %122 in 1 : vector<8x64xf32>, vector<8x64xf32> -> vector<8x128xf32>
    %cst_33 = arith.constant dense<0.000000e+00> : vector<8x256xf32>
    %154 = tpu.matmul %153, %1, %cst_33 {dimension_numbers = #tpu.dot_dimension_numbers<[1], [0], [0], [1], [0, 0, 1, 1], [], []>} : vector<8x128xf32>, vector<128x256xf32>, vector<8x256xf32> -> vector<8x256xf32>
    %c0_34 = arith.constant 0 : index
    %c0_35 = arith.constant 0 : index
    %155 = vector.load %arg4[%c0_34, %c0_35] : memref<1x256xf32, #tpu.memory_space<vmem>>, vector<1x256xf32>
    %156 = vector.broadcast %155 : vector<1x256xf32> to vector<8x256xf32>
    %157 = arith.addf %154, %156 : vector<8x256xf32>
    %158 = vector.extract_strided_slice %157 {offsets = [0, 0], sizes = [8, 64], strides = [1, 1]} : vector<8x256xf32> to vector<8x64xf32>
    %159 = arith.negf %158 : vector<8x64xf32>
    %160 = math.exp %159 : vector<8x64xf32>
    %cst_36 = arith.constant 1.000000e+00 : f32
    %161 = vector.broadcast %cst_36 : f32 to vector<8x64xf32>
    %162 = arith.addf %161, %160 : vector<8x64xf32>
    %163 = arith.divf %161, %162 : vector<8x64xf32>
    %164 = vector.extract_strided_slice %157 {offsets = [0, 64], sizes = [8, 64], strides = [1, 1]} : vector<8x256xf32> to vector<8x64xf32>
    %165 = arith.negf %164 : vector<8x64xf32>
    %166 = math.exp %165 : vector<8x64xf32>
    %cst_37 = arith.constant 1.000000e+00 : f32
    %167 = vector.broadcast %cst_37 : f32 to vector<8x64xf32>
    %168 = arith.addf %167, %166 : vector<8x64xf32>
    %169 = arith.divf %167, %168 : vector<8x64xf32>
    %170 = vector.extract_strided_slice %157 {offsets = [0, 128], sizes = [8, 64], strides = [1, 1]} : vector<8x256xf32> to vector<8x64xf32>
    %171 = math.tanh %170 : vector<8x64xf32>
    %172 = vector.extract_strided_slice %157 {offsets = [0, 192], sizes = [8, 64], strides = [1, 1]} : vector<8x256xf32> to vector<8x64xf32>
    %173 = arith.negf %172 : vector<8x64xf32>
    %174 = math.exp %173 : vector<8x64xf32>
    %cst_38 = arith.constant 1.000000e+00 : f32
    %175 = vector.broadcast %cst_38 : f32 to vector<8x64xf32>
    %176 = arith.addf %175, %174 : vector<8x64xf32>
    %177 = arith.divf %175, %176 : vector<8x64xf32>
    %178 = arith.mulf %169, %120 : vector<8x64xf32>
    %179 = arith.mulf %163, %171 : vector<8x64xf32>
    %180 = arith.addf %178, %179 : vector<8x64xf32>
    %181 = math.tanh %180 : vector<8x64xf32>
    %182 = arith.mulf %177, %181 : vector<8x64xf32>
    %c3_i32 = arith.constant 3 : i32
    %cst_39 = arith.constant dense<0.000000e+00> : vector<8x256xf32>
    %183 = tpu.matmul %152, %0, %cst_39 {dimension_numbers = #tpu.dot_dimension_numbers<[1], [0], [0], [1], [0, 0, 1, 1], [], []>} : vector<8x64xf32>, vector<64x256xf32>, vector<8x256xf32> -> vector<8x256xf32>
    %184 = arith.index_cast %c3_i32 : i32 to index
    %c0_40 = arith.constant 0 : index
    %c0_41 = arith.constant 0 : index
    %185 = vector.load %arg1[%184, %c0_40, %c0_41] : memref<8x8x256xf32, #tpu.memory_space<vmem>>, vector<1x8x256xf32>
    %186 = vector.shape_cast %185 : vector<1x8x256xf32> to vector<8x256xf32>
    %187 = arith.addf %183, %186 : vector<8x256xf32>
    %188 = vector.extract_strided_slice %187 {offsets = [0, 0], sizes = [8, 64], strides = [1, 1]} : vector<8x256xf32> to vector<8x64xf32>
    %189 = arith.negf %188 : vector<8x64xf32>
    %190 = math.exp %189 : vector<8x64xf32>
    %cst_42 = arith.constant 1.000000e+00 : f32
    %191 = vector.broadcast %cst_42 : f32 to vector<8x64xf32>
    %192 = arith.addf %191, %190 : vector<8x64xf32>
    %193 = arith.divf %191, %192 : vector<8x64xf32>
    %194 = vector.extract_strided_slice %187 {offsets = [0, 64], sizes = [8, 64], strides = [1, 1]} : vector<8x256xf32> to vector<8x64xf32>
    %195 = arith.negf %194 : vector<8x64xf32>
    %196 = math.exp %195 : vector<8x64xf32>
    %cst_43 = arith.constant 1.000000e+00 : f32
    %197 = vector.broadcast %cst_43 : f32 to vector<8x64xf32>
    %198 = arith.addf %197, %196 : vector<8x64xf32>
    %199 = arith.divf %197, %198 : vector<8x64xf32>
    %200 = vector.extract_strided_slice %187 {offsets = [0, 128], sizes = [8, 64], strides = [1, 1]} : vector<8x256xf32> to vector<8x64xf32>
    %201 = math.tanh %200 : vector<8x64xf32>
    %202 = vector.extract_strided_slice %187 {offsets = [0, 192], sizes = [8, 64], strides = [1, 1]} : vector<8x256xf32> to vector<8x64xf32>
    %203 = arith.negf %202 : vector<8x64xf32>
    %204 = math.exp %203 : vector<8x64xf32>
    %cst_44 = arith.constant 1.000000e+00 : f32
    %205 = vector.broadcast %cst_44 : f32 to vector<8x64xf32>
    %206 = arith.addf %205, %204 : vector<8x64xf32>
    %207 = arith.divf %205, %206 : vector<8x64xf32>
    %208 = arith.mulf %199, %150 : vector<8x64xf32>
    %209 = arith.mulf %193, %201 : vector<8x64xf32>
    %210 = arith.addf %208, %209 : vector<8x64xf32>
    %211 = math.tanh %210 : vector<8x64xf32>
    %212 = arith.mulf %207, %211 : vector<8x64xf32>
    %213 = tpu.concatenate %212, %182 in 1 : vector<8x64xf32>, vector<8x64xf32> -> vector<8x128xf32>
    %cst_45 = arith.constant dense<0.000000e+00> : vector<8x256xf32>
    %214 = tpu.matmul %213, %1, %cst_45 {dimension_numbers = #tpu.dot_dimension_numbers<[1], [0], [0], [1], [0, 0, 1, 1], [], []>} : vector<8x128xf32>, vector<128x256xf32>, vector<8x256xf32> -> vector<8x256xf32>
    %c0_46 = arith.constant 0 : index
    %c0_47 = arith.constant 0 : index
    %215 = vector.load %arg4[%c0_46, %c0_47] : memref<1x256xf32, #tpu.memory_space<vmem>>, vector<1x256xf32>
    %216 = vector.broadcast %215 : vector<1x256xf32> to vector<8x256xf32>
    %217 = arith.addf %214, %216 : vector<8x256xf32>
    %218 = vector.extract_strided_slice %217 {offsets = [0, 0], sizes = [8, 64], strides = [1, 1]} : vector<8x256xf32> to vector<8x64xf32>
    %219 = arith.negf %218 : vector<8x64xf32>
    %220 = math.exp %219 : vector<8x64xf32>
    %cst_48 = arith.constant 1.000000e+00 : f32
    %221 = vector.broadcast %cst_48 : f32 to vector<8x64xf32>
    %222 = arith.addf %221, %220 : vector<8x64xf32>
    %223 = arith.divf %221, %222 : vector<8x64xf32>
    %224 = vector.extract_strided_slice %217 {offsets = [0, 64], sizes = [8, 64], strides = [1, 1]} : vector<8x256xf32> to vector<8x64xf32>
    %225 = arith.negf %224 : vector<8x64xf32>
    %226 = math.exp %225 : vector<8x64xf32>
    %cst_49 = arith.constant 1.000000e+00 : f32
    %227 = vector.broadcast %cst_49 : f32 to vector<8x64xf32>
    %228 = arith.addf %227, %226 : vector<8x64xf32>
    %229 = arith.divf %227, %228 : vector<8x64xf32>
    %230 = vector.extract_strided_slice %217 {offsets = [0, 128], sizes = [8, 64], strides = [1, 1]} : vector<8x256xf32> to vector<8x64xf32>
    %231 = math.tanh %230 : vector<8x64xf32>
    %232 = vector.extract_strided_slice %217 {offsets = [0, 192], sizes = [8, 64], strides = [1, 1]} : vector<8x256xf32> to vector<8x64xf32>
    %233 = arith.negf %232 : vector<8x64xf32>
    %234 = math.exp %233 : vector<8x64xf32>
    %cst_50 = arith.constant 1.000000e+00 : f32
    %235 = vector.broadcast %cst_50 : f32 to vector<8x64xf32>
    %236 = arith.addf %235, %234 : vector<8x64xf32>
    %237 = arith.divf %235, %236 : vector<8x64xf32>
    %238 = arith.mulf %229, %180 : vector<8x64xf32>
    %239 = arith.mulf %223, %231 : vector<8x64xf32>
    %240 = arith.addf %238, %239 : vector<8x64xf32>
    %241 = math.tanh %240 : vector<8x64xf32>
    %242 = arith.mulf %237, %241 : vector<8x64xf32>
    %c4_i32 = arith.constant 4 : i32
    %cst_51 = arith.constant dense<0.000000e+00> : vector<8x256xf32>
    %243 = tpu.matmul %212, %0, %cst_51 {dimension_numbers = #tpu.dot_dimension_numbers<[1], [0], [0], [1], [0, 0, 1, 1], [], []>} : vector<8x64xf32>, vector<64x256xf32>, vector<8x256xf32> -> vector<8x256xf32>
    %244 = arith.index_cast %c4_i32 : i32 to index
    %c0_52 = arith.constant 0 : index
    %c0_53 = arith.constant 0 : index
    %245 = vector.load %arg1[%244, %c0_52, %c0_53] : memref<8x8x256xf32, #tpu.memory_space<vmem>>, vector<1x8x256xf32>
    %246 = vector.shape_cast %245 : vector<1x8x256xf32> to vector<8x256xf32>
    %247 = arith.addf %243, %246 : vector<8x256xf32>
    %248 = vector.extract_strided_slice %247 {offsets = [0, 0], sizes = [8, 64], strides = [1, 1]} : vector<8x256xf32> to vector<8x64xf32>
    %249 = arith.negf %248 : vector<8x64xf32>
    %250 = math.exp %249 : vector<8x64xf32>
    %cst_54 = arith.constant 1.000000e+00 : f32
    %251 = vector.broadcast %cst_54 : f32 to vector<8x64xf32>
    %252 = arith.addf %251, %250 : vector<8x64xf32>
    %253 = arith.divf %251, %252 : vector<8x64xf32>
    %254 = vector.extract_strided_slice %247 {offsets = [0, 64], sizes = [8, 64], strides = [1, 1]} : vector<8x256xf32> to vector<8x64xf32>
    %255 = arith.negf %254 : vector<8x64xf32>
    %256 = math.exp %255 : vector<8x64xf32>
    %cst_55 = arith.constant 1.000000e+00 : f32
    %257 = vector.broadcast %cst_55 : f32 to vector<8x64xf32>
    %258 = arith.addf %257, %256 : vector<8x64xf32>
    %259 = arith.divf %257, %258 : vector<8x64xf32>
    %260 = vector.extract_strided_slice %247 {offsets = [0, 128], sizes = [8, 64], strides = [1, 1]} : vector<8x256xf32> to vector<8x64xf32>
    %261 = math.tanh %260 : vector<8x64xf32>
    %262 = vector.extract_strided_slice %247 {offsets = [0, 192], sizes = [8, 64], strides = [1, 1]} : vector<8x256xf32> to vector<8x64xf32>
    %263 = arith.negf %262 : vector<8x64xf32>
    %264 = math.exp %263 : vector<8x64xf32>
    %cst_56 = arith.constant 1.000000e+00 : f32
    %265 = vector.broadcast %cst_56 : f32 to vector<8x64xf32>
    %266 = arith.addf %265, %264 : vector<8x64xf32>
    %267 = arith.divf %265, %266 : vector<8x64xf32>
    %268 = arith.mulf %259, %210 : vector<8x64xf32>
    %269 = arith.mulf %253, %261 : vector<8x64xf32>
    %270 = arith.addf %268, %269 : vector<8x64xf32>
    %271 = math.tanh %270 : vector<8x64xf32>
    %272 = arith.mulf %267, %271 : vector<8x64xf32>
    %273 = tpu.concatenate %272, %242 in 1 : vector<8x64xf32>, vector<8x64xf32> -> vector<8x128xf32>
    %cst_57 = arith.constant dense<0.000000e+00> : vector<8x256xf32>
    %274 = tpu.matmul %273, %1, %cst_57 {dimension_numbers = #tpu.dot_dimension_numbers<[1], [0], [0], [1], [0, 0, 1, 1], [], []>} : vector<8x128xf32>, vector<128x256xf32>, vector<8x256xf32> -> vector<8x256xf32>
    %c0_58 = arith.constant 0 : index
    %c0_59 = arith.constant 0 : index
    %275 = vector.load %arg4[%c0_58, %c0_59] : memref<1x256xf32, #tpu.memory_space<vmem>>, vector<1x256xf32>
    %276 = vector.broadcast %275 : vector<1x256xf32> to vector<8x256xf32>
    %277 = arith.addf %274, %276 : vector<8x256xf32>
    %278 = vector.extract_strided_slice %277 {offsets = [0, 0], sizes = [8, 64], strides = [1, 1]} : vector<8x256xf32> to vector<8x64xf32>
    %279 = arith.negf %278 : vector<8x64xf32>
    %280 = math.exp %279 : vector<8x64xf32>
    %cst_60 = arith.constant 1.000000e+00 : f32
    %281 = vector.broadcast %cst_60 : f32 to vector<8x64xf32>
    %282 = arith.addf %281, %280 : vector<8x64xf32>
    %283 = arith.divf %281, %282 : vector<8x64xf32>
    %284 = vector.extract_strided_slice %277 {offsets = [0, 64], sizes = [8, 64], strides = [1, 1]} : vector<8x256xf32> to vector<8x64xf32>
    %285 = arith.negf %284 : vector<8x64xf32>
    %286 = math.exp %285 : vector<8x64xf32>
    %cst_61 = arith.constant 1.000000e+00 : f32
    %287 = vector.broadcast %cst_61 : f32 to vector<8x64xf32>
    %288 = arith.addf %287, %286 : vector<8x64xf32>
    %289 = arith.divf %287, %288 : vector<8x64xf32>
    %290 = vector.extract_strided_slice %277 {offsets = [0, 128], sizes = [8, 64], strides = [1, 1]} : vector<8x256xf32> to vector<8x64xf32>
    %291 = math.tanh %290 : vector<8x64xf32>
    %292 = vector.extract_strided_slice %277 {offsets = [0, 192], sizes = [8, 64], strides = [1, 1]} : vector<8x256xf32> to vector<8x64xf32>
    %293 = arith.negf %292 : vector<8x64xf32>
    %294 = math.exp %293 : vector<8x64xf32>
    %cst_62 = arith.constant 1.000000e+00 : f32
    %295 = vector.broadcast %cst_62 : f32 to vector<8x64xf32>
    %296 = arith.addf %295, %294 : vector<8x64xf32>
    %297 = arith.divf %295, %296 : vector<8x64xf32>
    %298 = arith.mulf %289, %240 : vector<8x64xf32>
    %299 = arith.mulf %283, %291 : vector<8x64xf32>
    %300 = arith.addf %298, %299 : vector<8x64xf32>
    %301 = math.tanh %300 : vector<8x64xf32>
    %302 = arith.mulf %297, %301 : vector<8x64xf32>
    %c5_i32 = arith.constant 5 : i32
    %cst_63 = arith.constant dense<0.000000e+00> : vector<8x256xf32>
    %303 = tpu.matmul %272, %0, %cst_63 {dimension_numbers = #tpu.dot_dimension_numbers<[1], [0], [0], [1], [0, 0, 1, 1], [], []>} : vector<8x64xf32>, vector<64x256xf32>, vector<8x256xf32> -> vector<8x256xf32>
    %304 = arith.index_cast %c5_i32 : i32 to index
    %c0_64 = arith.constant 0 : index
    %c0_65 = arith.constant 0 : index
    %305 = vector.load %arg1[%304, %c0_64, %c0_65] : memref<8x8x256xf32, #tpu.memory_space<vmem>>, vector<1x8x256xf32>
    %306 = vector.shape_cast %305 : vector<1x8x256xf32> to vector<8x256xf32>
    %307 = arith.addf %303, %306 : vector<8x256xf32>
    %308 = vector.extract_strided_slice %307 {offsets = [0, 0], sizes = [8, 64], strides = [1, 1]} : vector<8x256xf32> to vector<8x64xf32>
    %309 = arith.negf %308 : vector<8x64xf32>
    %310 = math.exp %309 : vector<8x64xf32>
    %cst_66 = arith.constant 1.000000e+00 : f32
    %311 = vector.broadcast %cst_66 : f32 to vector<8x64xf32>
    %312 = arith.addf %311, %310 : vector<8x64xf32>
    %313 = arith.divf %311, %312 : vector<8x64xf32>
    %314 = vector.extract_strided_slice %307 {offsets = [0, 64], sizes = [8, 64], strides = [1, 1]} : vector<8x256xf32> to vector<8x64xf32>
    %315 = arith.negf %314 : vector<8x64xf32>
    %316 = math.exp %315 : vector<8x64xf32>
    %cst_67 = arith.constant 1.000000e+00 : f32
    %317 = vector.broadcast %cst_67 : f32 to vector<8x64xf32>
    %318 = arith.addf %317, %316 : vector<8x64xf32>
    %319 = arith.divf %317, %318 : vector<8x64xf32>
    %320 = vector.extract_strided_slice %307 {offsets = [0, 128], sizes = [8, 64], strides = [1, 1]} : vector<8x256xf32> to vector<8x64xf32>
    %321 = math.tanh %320 : vector<8x64xf32>
    %322 = vector.extract_strided_slice %307 {offsets = [0, 192], sizes = [8, 64], strides = [1, 1]} : vector<8x256xf32> to vector<8x64xf32>
    %323 = arith.negf %322 : vector<8x64xf32>
    %324 = math.exp %323 : vector<8x64xf32>
    %cst_68 = arith.constant 1.000000e+00 : f32
    %325 = vector.broadcast %cst_68 : f32 to vector<8x64xf32>
    %326 = arith.addf %325, %324 : vector<8x64xf32>
    %327 = arith.divf %325, %326 : vector<8x64xf32>
    %328 = arith.mulf %319, %270 : vector<8x64xf32>
    %329 = arith.mulf %313, %321 : vector<8x64xf32>
    %330 = arith.addf %328, %329 : vector<8x64xf32>
    %331 = math.tanh %330 : vector<8x64xf32>
    %332 = arith.mulf %327, %331 : vector<8x64xf32>
    %333 = tpu.concatenate %332, %302 in 1 : vector<8x64xf32>, vector<8x64xf32> -> vector<8x128xf32>
    %cst_69 = arith.constant dense<0.000000e+00> : vector<8x256xf32>
    %334 = tpu.matmul %333, %1, %cst_69 {dimension_numbers = #tpu.dot_dimension_numbers<[1], [0], [0], [1], [0, 0, 1, 1], [], []>} : vector<8x128xf32>, vector<128x256xf32>, vector<8x256xf32> -> vector<8x256xf32>
    %c0_70 = arith.constant 0 : index
    %c0_71 = arith.constant 0 : index
    %335 = vector.load %arg4[%c0_70, %c0_71] : memref<1x256xf32, #tpu.memory_space<vmem>>, vector<1x256xf32>
    %336 = vector.broadcast %335 : vector<1x256xf32> to vector<8x256xf32>
    %337 = arith.addf %334, %336 : vector<8x256xf32>
    %338 = vector.extract_strided_slice %337 {offsets = [0, 0], sizes = [8, 64], strides = [1, 1]} : vector<8x256xf32> to vector<8x64xf32>
    %339 = arith.negf %338 : vector<8x64xf32>
    %340 = math.exp %339 : vector<8x64xf32>
    %cst_72 = arith.constant 1.000000e+00 : f32
    %341 = vector.broadcast %cst_72 : f32 to vector<8x64xf32>
    %342 = arith.addf %341, %340 : vector<8x64xf32>
    %343 = arith.divf %341, %342 : vector<8x64xf32>
    %344 = vector.extract_strided_slice %337 {offsets = [0, 64], sizes = [8, 64], strides = [1, 1]} : vector<8x256xf32> to vector<8x64xf32>
    %345 = arith.negf %344 : vector<8x64xf32>
    %346 = math.exp %345 : vector<8x64xf32>
    %cst_73 = arith.constant 1.000000e+00 : f32
    %347 = vector.broadcast %cst_73 : f32 to vector<8x64xf32>
    %348 = arith.addf %347, %346 : vector<8x64xf32>
    %349 = arith.divf %347, %348 : vector<8x64xf32>
    %350 = vector.extract_strided_slice %337 {offsets = [0, 128], sizes = [8, 64], strides = [1, 1]} : vector<8x256xf32> to vector<8x64xf32>
    %351 = math.tanh %350 : vector<8x64xf32>
    %352 = vector.extract_strided_slice %337 {offsets = [0, 192], sizes = [8, 64], strides = [1, 1]} : vector<8x256xf32> to vector<8x64xf32>
    %353 = arith.negf %352 : vector<8x64xf32>
    %354 = math.exp %353 : vector<8x64xf32>
    %cst_74 = arith.constant 1.000000e+00 : f32
    %355 = vector.broadcast %cst_74 : f32 to vector<8x64xf32>
    %356 = arith.addf %355, %354 : vector<8x64xf32>
    %357 = arith.divf %355, %356 : vector<8x64xf32>
    %358 = arith.mulf %349, %300 : vector<8x64xf32>
    %359 = arith.mulf %343, %351 : vector<8x64xf32>
    %360 = arith.addf %358, %359 : vector<8x64xf32>
    %361 = math.tanh %360 : vector<8x64xf32>
    %362 = arith.mulf %357, %361 : vector<8x64xf32>
    %c6_i32 = arith.constant 6 : i32
    %cst_75 = arith.constant dense<0.000000e+00> : vector<8x256xf32>
    %363 = tpu.matmul %332, %0, %cst_75 {dimension_numbers = #tpu.dot_dimension_numbers<[1], [0], [0], [1], [0, 0, 1, 1], [], []>} : vector<8x64xf32>, vector<64x256xf32>, vector<8x256xf32> -> vector<8x256xf32>
    %364 = arith.index_cast %c6_i32 : i32 to index
    %c0_76 = arith.constant 0 : index
    %c0_77 = arith.constant 0 : index
    %365 = vector.load %arg1[%364, %c0_76, %c0_77] : memref<8x8x256xf32, #tpu.memory_space<vmem>>, vector<1x8x256xf32>
    %366 = vector.shape_cast %365 : vector<1x8x256xf32> to vector<8x256xf32>
    %367 = arith.addf %363, %366 : vector<8x256xf32>
    %368 = vector.extract_strided_slice %367 {offsets = [0, 0], sizes = [8, 64], strides = [1, 1]} : vector<8x256xf32> to vector<8x64xf32>
    %369 = arith.negf %368 : vector<8x64xf32>
    %370 = math.exp %369 : vector<8x64xf32>
    %cst_78 = arith.constant 1.000000e+00 : f32
    %371 = vector.broadcast %cst_78 : f32 to vector<8x64xf32>
    %372 = arith.addf %371, %370 : vector<8x64xf32>
    %373 = arith.divf %371, %372 : vector<8x64xf32>
    %374 = vector.extract_strided_slice %367 {offsets = [0, 64], sizes = [8, 64], strides = [1, 1]} : vector<8x256xf32> to vector<8x64xf32>
    %375 = arith.negf %374 : vector<8x64xf32>
    %376 = math.exp %375 : vector<8x64xf32>
    %cst_79 = arith.constant 1.000000e+00 : f32
    %377 = vector.broadcast %cst_79 : f32 to vector<8x64xf32>
    %378 = arith.addf %377, %376 : vector<8x64xf32>
    %379 = arith.divf %377, %378 : vector<8x64xf32>
    %380 = vector.extract_strided_slice %367 {offsets = [0, 128], sizes = [8, 64], strides = [1, 1]} : vector<8x256xf32> to vector<8x64xf32>
    %381 = math.tanh %380 : vector<8x64xf32>
    %382 = vector.extract_strided_slice %367 {offsets = [0, 192], sizes = [8, 64], strides = [1, 1]} : vector<8x256xf32> to vector<8x64xf32>
    %383 = arith.negf %382 : vector<8x64xf32>
    %384 = math.exp %383 : vector<8x64xf32>
    %cst_80 = arith.constant 1.000000e+00 : f32
    %385 = vector.broadcast %cst_80 : f32 to vector<8x64xf32>
    %386 = arith.addf %385, %384 : vector<8x64xf32>
    %387 = arith.divf %385, %386 : vector<8x64xf32>
    %388 = arith.mulf %379, %330 : vector<8x64xf32>
    %389 = arith.mulf %373, %381 : vector<8x64xf32>
    %390 = arith.addf %388, %389 : vector<8x64xf32>
    %391 = math.tanh %390 : vector<8x64xf32>
    %392 = arith.mulf %387, %391 : vector<8x64xf32>
    %393 = tpu.concatenate %392, %362 in 1 : vector<8x64xf32>, vector<8x64xf32> -> vector<8x128xf32>
    %cst_81 = arith.constant dense<0.000000e+00> : vector<8x256xf32>
    %394 = tpu.matmul %393, %1, %cst_81 {dimension_numbers = #tpu.dot_dimension_numbers<[1], [0], [0], [1], [0, 0, 1, 1], [], []>} : vector<8x128xf32>, vector<128x256xf32>, vector<8x256xf32> -> vector<8x256xf32>
    %c0_82 = arith.constant 0 : index
    %c0_83 = arith.constant 0 : index
    %395 = vector.load %arg4[%c0_82, %c0_83] : memref<1x256xf32, #tpu.memory_space<vmem>>, vector<1x256xf32>
    %396 = vector.broadcast %395 : vector<1x256xf32> to vector<8x256xf32>
    %397 = arith.addf %394, %396 : vector<8x256xf32>
    %398 = vector.extract_strided_slice %397 {offsets = [0, 0], sizes = [8, 64], strides = [1, 1]} : vector<8x256xf32> to vector<8x64xf32>
    %399 = arith.negf %398 : vector<8x64xf32>
    %400 = math.exp %399 : vector<8x64xf32>
    %cst_84 = arith.constant 1.000000e+00 : f32
    %401 = vector.broadcast %cst_84 : f32 to vector<8x64xf32>
    %402 = arith.addf %401, %400 : vector<8x64xf32>
    %403 = arith.divf %401, %402 : vector<8x64xf32>
    %404 = vector.extract_strided_slice %397 {offsets = [0, 64], sizes = [8, 64], strides = [1, 1]} : vector<8x256xf32> to vector<8x64xf32>
    %405 = arith.negf %404 : vector<8x64xf32>
    %406 = math.exp %405 : vector<8x64xf32>
    %cst_85 = arith.constant 1.000000e+00 : f32
    %407 = vector.broadcast %cst_85 : f32 to vector<8x64xf32>
    %408 = arith.addf %407, %406 : vector<8x64xf32>
    %409 = arith.divf %407, %408 : vector<8x64xf32>
    %410 = vector.extract_strided_slice %397 {offsets = [0, 128], sizes = [8, 64], strides = [1, 1]} : vector<8x256xf32> to vector<8x64xf32>
    %411 = math.tanh %410 : vector<8x64xf32>
    %412 = vector.extract_strided_slice %397 {offsets = [0, 192], sizes = [8, 64], strides = [1, 1]} : vector<8x256xf32> to vector<8x64xf32>
    %413 = arith.negf %412 : vector<8x64xf32>
    %414 = math.exp %413 : vector<8x64xf32>
    %cst_86 = arith.constant 1.000000e+00 : f32
    %415 = vector.broadcast %cst_86 : f32 to vector<8x64xf32>
    %416 = arith.addf %415, %414 : vector<8x64xf32>
    %417 = arith.divf %415, %416 : vector<8x64xf32>
    %418 = arith.mulf %409, %360 : vector<8x64xf32>
    %419 = arith.mulf %403, %411 : vector<8x64xf32>
    %420 = arith.addf %418, %419 : vector<8x64xf32>
    %421 = math.tanh %420 : vector<8x64xf32>
    %422 = arith.mulf %417, %421 : vector<8x64xf32>
    %c7_i32 = arith.constant 7 : i32
    %cst_87 = arith.constant dense<0.000000e+00> : vector<8x256xf32>
    %423 = tpu.matmul %392, %0, %cst_87 {dimension_numbers = #tpu.dot_dimension_numbers<[1], [0], [0], [1], [0, 0, 1, 1], [], []>} : vector<8x64xf32>, vector<64x256xf32>, vector<8x256xf32> -> vector<8x256xf32>
    %424 = arith.index_cast %c7_i32 : i32 to index
    %c0_88 = arith.constant 0 : index
    %c0_89 = arith.constant 0 : index
    %425 = vector.load %arg1[%424, %c0_88, %c0_89] : memref<8x8x256xf32, #tpu.memory_space<vmem>>, vector<1x8x256xf32>
    %426 = vector.shape_cast %425 : vector<1x8x256xf32> to vector<8x256xf32>
    %427 = arith.addf %423, %426 : vector<8x256xf32>
    %428 = vector.extract_strided_slice %427 {offsets = [0, 0], sizes = [8, 64], strides = [1, 1]} : vector<8x256xf32> to vector<8x64xf32>
    %429 = arith.negf %428 : vector<8x64xf32>
    %430 = math.exp %429 : vector<8x64xf32>
    %cst_90 = arith.constant 1.000000e+00 : f32
    %431 = vector.broadcast %cst_90 : f32 to vector<8x64xf32>
    %432 = arith.addf %431, %430 : vector<8x64xf32>
    %433 = arith.divf %431, %432 : vector<8x64xf32>
    %434 = vector.extract_strided_slice %427 {offsets = [0, 64], sizes = [8, 64], strides = [1, 1]} : vector<8x256xf32> to vector<8x64xf32>
    %435 = arith.negf %434 : vector<8x64xf32>
    %436 = math.exp %435 : vector<8x64xf32>
    %cst_91 = arith.constant 1.000000e+00 : f32
    %437 = vector.broadcast %cst_91 : f32 to vector<8x64xf32>
    %438 = arith.addf %437, %436 : vector<8x64xf32>
    %439 = arith.divf %437, %438 : vector<8x64xf32>
    %440 = vector.extract_strided_slice %427 {offsets = [0, 128], sizes = [8, 64], strides = [1, 1]} : vector<8x256xf32> to vector<8x64xf32>
    %441 = math.tanh %440 : vector<8x64xf32>
    %442 = vector.extract_strided_slice %427 {offsets = [0, 192], sizes = [8, 64], strides = [1, 1]} : vector<8x256xf32> to vector<8x64xf32>
    %443 = arith.negf %442 : vector<8x64xf32>
    %444 = math.exp %443 : vector<8x64xf32>
    %cst_92 = arith.constant 1.000000e+00 : f32
    %445 = vector.broadcast %cst_92 : f32 to vector<8x64xf32>
    %446 = arith.addf %445, %444 : vector<8x64xf32>
    %447 = arith.divf %445, %446 : vector<8x64xf32>
    %448 = arith.mulf %439, %390 : vector<8x64xf32>
    %449 = arith.mulf %433, %441 : vector<8x64xf32>
    %450 = arith.addf %448, %449 : vector<8x64xf32>
    %451 = math.tanh %450 : vector<8x64xf32>
    %452 = arith.mulf %447, %451 : vector<8x64xf32>
    %453 = tpu.concatenate %452, %422 in 1 : vector<8x64xf32>, vector<8x64xf32> -> vector<8x128xf32>
    %cst_93 = arith.constant dense<0.000000e+00> : vector<8x256xf32>
    %454 = tpu.matmul %453, %1, %cst_93 {dimension_numbers = #tpu.dot_dimension_numbers<[1], [0], [0], [1], [0, 0, 1, 1], [], []>} : vector<8x128xf32>, vector<128x256xf32>, vector<8x256xf32> -> vector<8x256xf32>
    %c0_94 = arith.constant 0 : index
    %c0_95 = arith.constant 0 : index
    %455 = vector.load %arg4[%c0_94, %c0_95] : memref<1x256xf32, #tpu.memory_space<vmem>>, vector<1x256xf32>
    %456 = vector.broadcast %455 : vector<1x256xf32> to vector<8x256xf32>
    %457 = arith.addf %454, %456 : vector<8x256xf32>
    %458 = vector.extract_strided_slice %457 {offsets = [0, 0], sizes = [8, 64], strides = [1, 1]} : vector<8x256xf32> to vector<8x64xf32>
    %459 = arith.negf %458 : vector<8x64xf32>
    %460 = math.exp %459 : vector<8x64xf32>
    %cst_96 = arith.constant 1.000000e+00 : f32
    %461 = vector.broadcast %cst_96 : f32 to vector<8x64xf32>
    %462 = arith.addf %461, %460 : vector<8x64xf32>
    %463 = arith.divf %461, %462 : vector<8x64xf32>
    %464 = vector.extract_strided_slice %457 {offsets = [0, 64], sizes = [8, 64], strides = [1, 1]} : vector<8x256xf32> to vector<8x64xf32>
    %465 = arith.negf %464 : vector<8x64xf32>
    %466 = math.exp %465 : vector<8x64xf32>
    %cst_97 = arith.constant 1.000000e+00 : f32
    %467 = vector.broadcast %cst_97 : f32 to vector<8x64xf32>
    %468 = arith.addf %467, %466 : vector<8x64xf32>
    %469 = arith.divf %467, %468 : vector<8x64xf32>
    %470 = vector.extract_strided_slice %457 {offsets = [0, 128], sizes = [8, 64], strides = [1, 1]} : vector<8x256xf32> to vector<8x64xf32>
    %471 = math.tanh %470 : vector<8x64xf32>
    %472 = vector.extract_strided_slice %457 {offsets = [0, 192], sizes = [8, 64], strides = [1, 1]} : vector<8x256xf32> to vector<8x64xf32>
    %473 = arith.negf %472 : vector<8x64xf32>
    %474 = math.exp %473 : vector<8x64xf32>
    %cst_98 = arith.constant 1.000000e+00 : f32
    %475 = vector.broadcast %cst_98 : f32 to vector<8x64xf32>
    %476 = arith.addf %475, %474 : vector<8x64xf32>
    %477 = arith.divf %475, %476 : vector<8x64xf32>
    %478 = arith.mulf %469, %420 : vector<8x64xf32>
    %479 = arith.mulf %463, %471 : vector<8x64xf32>
    %480 = arith.addf %478, %479 : vector<8x64xf32>
    %481 = math.tanh %480 : vector<8x64xf32>
    %482 = arith.mulf %477, %481 : vector<8x64xf32>
    %c8_i32 = arith.constant 8 : i32
    %c0_99 = arith.constant 0 : index
    %c0_100 = arith.constant 0 : index
    %483 = vector.load %arg5[%c0_99, %c0_100] : memref<64x128xf32, #tpu.memory_space<vmem>>, vector<64x128xf32>
    %cst_101 = arith.constant dense<0.000000e+00> : vector<8x128xf32>
    %484 = tpu.matmul %482, %483, %cst_101 {dimension_numbers = #tpu.dot_dimension_numbers<[1], [0], [0], [1], [0, 0, 1, 1], [], []>} : vector<8x64xf32>, vector<64x128xf32>, vector<8x128xf32> -> vector<8x128xf32>
    %c0_102 = arith.constant 0 : index
    %c0_103 = arith.constant 0 : index
    %485 = vector.load %arg6[%c0_102, %c0_103] : memref<1x128xf32, #tpu.memory_space<vmem>>, vector<1x128xf32>
    %486 = vector.broadcast %485 : vector<1x128xf32> to vector<8x128xf32>
    %487 = arith.addf %484, %486 : vector<8x128xf32>
    %cst_104 = arith.constant 0.000000e+00 : f32
    %488 = vector.broadcast %cst_104 : f32 to vector<8x128xf32>
    %489 = arith.maximumf %487, %488 : vector<8x128xf32>
    %c0_105 = arith.constant 0 : index
    %c0_106 = arith.constant 0 : index
    %490 = vector.load %arg7[%c0_105, %c0_106] : memref<128x64xf32, #tpu.memory_space<vmem>>, vector<128x64xf32>
    %cst_107 = arith.constant dense<0.000000e+00> : vector<8x64xf32>
    %491 = tpu.matmul %489, %490, %cst_107 {dimension_numbers = #tpu.dot_dimension_numbers<[1], [0], [0], [1], [0, 0, 1, 1], [], []>} : vector<8x128xf32>, vector<128x64xf32>, vector<8x64xf32> -> vector<8x64xf32>
    %c0_108 = arith.constant 0 : index
    %c0_109 = arith.constant 0 : index
    %492 = vector.load %arg8[%c0_108, %c0_109] : memref<1x64xf32, #tpu.memory_space<vmem>>, vector<1x64xf32>
    %493 = vector.broadcast %492 : vector<1x64xf32> to vector<8x64xf32>
    %494 = arith.addf %491, %493 : vector<8x64xf32>
    %cst_110 = arith.constant 0.000000e+00 : f32
    %495 = vector.broadcast %cst_110 : f32 to vector<8x64xf32>
    %496 = arith.maximumf %494, %495 : vector<8x64xf32>
    %c0_111 = arith.constant 0 : index
    %c0_112 = arith.constant 0 : index
    %497 = vector.load %arg9[%c0_111, %c0_112] : memref<64x128xf32, #tpu.memory_space<vmem>>, vector<64x128xf32>
    %cst_113 = arith.constant dense<0.000000e+00> : vector<8x128xf32>
    %498 = tpu.matmul %496, %497, %cst_113 {dimension_numbers = #tpu.dot_dimension_numbers<[1], [0], [0], [1], [0, 0, 1, 1], [], []>} : vector<8x64xf32>, vector<64x128xf32>, vector<8x128xf32> -> vector<8x128xf32>
    %c0_114 = arith.constant 0 : index
    %c0_115 = arith.constant 0 : index
    %499 = vector.load %arg10[%c0_114, %c0_115] : memref<1x128xf32, #tpu.memory_space<vmem>>, vector<1x128xf32>
    %500 = vector.broadcast %499 : vector<1x128xf32> to vector<8x128xf32>
    %501 = arith.addf %498, %500 : vector<8x128xf32>
    %c0_116 = arith.constant 0 : index
    %c0_117 = arith.constant 0 : index
    %502 = vector.load %arg11[%c0_116, %c0_117] : memref<8x128xf32, #tpu.memory_space<vmem>>, vector<8x128xf32>
    tpu.vector_store %arg11[%c0_116, %c0_117], %501 {strides = array<i32>} : memref<8x128xf32, #tpu.memory_space<vmem>>, vector<8x128xf32>,
    return
  }
  func.func @transform_0(%arg0: i32) -> (i32, i32, i32) {
    %c0_i32 = arith.constant 0 : i32
    %c0_i32_0 = arith.constant 0 : i32
    %c0_i32_1 = arith.constant 0 : i32
    return %c0_i32, %arg0, %c0_i32_0 : i32, i32, i32
  }
  func.func @transform_1(%arg0: i32) -> (i32, i32) {
    %c0_i32 = arith.constant 0 : i32
    %c0_i32_0 = arith.constant 0 : i32
    %c0_i32_1 = arith.constant 0 : i32
    return %c0_i32, %c0_i32_0 : i32, i32
  }
  func.func @transform_2(%arg0: i32) -> (i32, i32) {
    %c0_i32 = arith.constant 0 : i32
    %c0_i32_0 = arith.constant 0 : i32
    %c0_i32_1 = arith.constant 0 : i32
    return %c0_i32, %c0_i32_0 : i32, i32
  }
  func.func @transform_3(%arg0: i32) -> (i32, i32) {
    %c0_i32 = arith.constant 0 : i32
    %c0_i32_0 = arith.constant 0 : i32
    %c0_i32_1 = arith.constant 0 : i32
    return %c0_i32, %c0_i32_0 : i32, i32
  }
  func.func @transform_4(%arg0: i32) -> (i32, i32) {
    %c0_i32 = arith.constant 0 : i32
    %c0_i32_0 = arith.constant 0 : i32
    %c0_i32_1 = arith.constant 0 : i32
    return %c0_i32, %c0_i32_0 : i32, i32
  }
  func.func @transform_5(%arg0: i32) -> (i32, i32) {
    %c0_i32 = arith.constant 0 : i32
    %c0_i32_0 = arith.constant 0 : i32
    %c0_i32_1 = arith.constant 0 : i32
    return %c0_i32, %c0_i32_0 : i32, i32
  }
  func.func @transform_6(%arg0: i32) -> (i32, i32) {
    %c0_i32 = arith.constant 0 : i32
    %c0_i32_0 = arith.constant 0 : i32
    %c0_i32_1 = arith.constant 0 : i32
    return %c0_i32, %c0_i32_0 : i32, i32
  }
  func.func @transform_7(%arg0: i32) -> (i32, i32) {
    %c0_i32 = arith.constant 0 : i32
    %c0_i32_0 = arith.constant 0 : i32
    %c0_i32_1 = arith.constant 0 : i32
    return %c0_i32, %c0_i32_0 : i32, i32
  }
  func.func @transform_8(%arg0: i32) -> (i32, i32) {
    %c0_i32 = arith.constant 0 : i32
    %c0_i32_0 = arith.constant 0 : i32
    %c0_i32_1 = arith.constant 0 : i32
    return %c0_i32, %c0_i32_0 : i32, i32
  }
  func.func @transform_9(%arg0: i32) -> (i32, i32) {
    %c0_i32 = arith.constant 0 : i32
    %c0_i32_0 = arith.constant 0 : i32
    %c0_i32_1 = arith.constant 0 : i32
    return %c0_i32, %c0_i32_0 : i32, i32
  }
  func.func @transform_10(%arg0: i32) -> (i32, i32) {
    %c0_i32 = arith.constant 0 : i32
    %c0_i32_0 = arith.constant 0 : i32
    return %arg0, %c0_i32 : i32, i32
  }
}

</mosaic_0001>

<llo_original>
// kernel: tpu_custom_call.1
$region0: #{tpu_custom_call.1}
  #allocation0 [shape = 'u32[]', space=smem, size = 0x4, offset = 0x4, fixed_abs, tag = 'smem constant byte address 0x4 - core index']
  #allocation1 [shape = 'u32[72,128]{1,0:T(1,128)}', space=vmem, size = 0x9000, scoped, tag = 'internal scratch']
  %s0 = inlined_call_operand.hbm [shape: f32[8,16,256], index: 0, kind: input, shape index: {}]
  %s1 = inlined_call_operand.vmem [shape: f32[64,256], index: 1, kind: input, shape index: {}]
  %s2 = inlined_call_operand.hbm [shape: f32[128,256], index: 2, kind: input, shape index: {}]
  %s3 = inlined_call_operand.vmem [shape: f32[1,256], index: 3, kind: input, shape index: {}]
  %s4 = inlined_call_operand.vmem [shape: f32[64,128], index: 4, kind: input, shape index: {}]
  %s5 = inlined_call_operand.hbm [shape: f32[1,128], index: 5, kind: input, shape index: {}]
  %s6 = inlined_call_operand.vmem [shape: f32[128,64], index: 6, kind: input, shape index: {}]
  %s7 = inlined_call_operand.vmem [shape: f32[1,64], index: 7, kind: input, shape index: {}]
  %s8 = inlined_call_operand.hbm [shape: f32[64,128], index: 8, kind: input, shape index: {}]
  %s9 = inlined_call_operand.vmem [shape: f32[1,128], index: 9, kind: input, shape index: {}]
  %s10 = inlined_call_operand.hbm [shape: f32[16,128], index: 10, kind: output, shape index: {}]
  %s11 = sld [smem:[#allocation0]]
  $region89: #{tpu_custom_call.1} parent=0
    _
  %s13 = ssub.s32 1, %s11
  %s14 = scalar_select 0, %s13, %s11
  $region1: #{tpu_custom_call.1} parent=0
    #allocation2 [shape = 'u8[131072]{0}', space=vmem, size = 0x20000, scoped, tag = 'input window, operand 0']
    #allocation3 [shape = 's32[2]{0}', space=sflag, size = 0x8, scoped, tag = 'scoped memory for tpu_custom_call.1']
    #allocation4 [shape = 's32[2]{0}', space=sflag, size = 0x8, scoped, tag = 'scoped memory for tpu_custom_call.1']
    #allocation5 [shape = 'u8[131072]{0}', space=vmem, size = 0x20000, scoped, tag = 'input window, operand 2, single buffered']
    #allocation6 [shape = 's32[1]{0}', space=sflag, size = 0x4, scoped, tag = 'scoped memory for tpu_custom_call.1']
    #allocation7 [shape = 'u8[512]{0}', space=vmem, size = 0x400, scoped, tag = 'input window, operand 5, single buffered']
    #allocation8 [shape = 'u8[32768]{0}', space=vmem, size = 0x8000, scoped, tag = 'input window, operand 8, single buffered']
    #allocation9 [shape = 's32[1]{0}', space=sflag, size = 0x4, scoped, tag = 'scoped memory for tpu_custom_call.1']
    #allocation10 [shape = 'u8[8192]{0}', space=vmem, size = 0x2000, scoped, tag = 'output window, operand 0']
    %15 = vsyncpa [#allocation3], 0
    %s16 = scalar_lea.sflag [#allocation3], 1
    %17 = vsyncpa %s16, 0
    %18 = vsyncpa [#allocation6], 0
    %19 = vsyncpa [#allocation9], 0
    %20 = vsyncpa [#allocation4], 0
    %s21 = scalar_lea.sflag [#allocation4], 1
    %22 = vsyncpa %s21, 0
    loop: start=0, step=1, limit=4
    $region2: #{tpu_custom_call.1} parent=1 // loop_pre_header
      _
    $region3: #{tpu_custom_call.1} parent=1 // loop_header
      %s24 = sphi 0, %s28
      %p25 = scmp.ge.s32.totalorder %s24, 4
      %s34 = sphi 0, %s36
      %s37 = sphi 0, %s34
      %s38 = sphi 0, %s37
      %s54 = sphi 0, %s38
      %s58 = sphi 0, %s58
      %s60 = sphi 0, %s58
      %s61 = sphi 0, %s60
      %s75 = sphi 0, %s61
      %s79 = sphi 0, %s79
      %s81 = sphi 0, %s79
      %s82 = sphi 0, %s81
      %s96 = sphi 0, %s82
      %s100 = sphi 0, %s100
      %s102 = sphi 0, %s100
      %s103 = sphi 0, %s102
      %s117 = sphi 0, %s103
      %s121 = sphi 0, %s121
      %s123 = sphi 0, %s121
      %s124 = sphi 0, %s123
      %s138 = sphi 0, %s124
      %s142 = sphi 0, %s142
      %s144 = sphi 0, %s142
      %s145 = sphi 0, %s144
      %s159 = sphi 0, %s145
      %s163 = sphi 0, %s163
      %s165 = sphi 0, %s163
      %s166 = sphi 0, %s165
      %s180 = sphi 0, %s166
      %s184 = sphi 0, %s184
      %s186 = sphi 0, %s184
      %s187 = sphi 0, %s186
      %s201 = sphi 0, %s187
      %s205 = sphi 0, %s205
      %s207 = sphi 0, %s205
      %s208 = sphi 0, %s207
      %s222 = sphi 0, %s208
      %s226 = sphi 0, %s226
      %s228 = sphi 0, %s226
      %s229 = sphi 0, %s228
      %s243 = sphi 0, %s229
      %s249 = sphi 0, %s251
      %s252 = sphi 0, %s249
      %s253 = sphi 0, %s252
      %s269 = sphi 0, %s253
    $region4: #{tpu_custom_call.1} parent=1 // loop_header_branch
      %27 = sbr.rel (%p25) target = $region8
    $region5: #{tpu_custom_call.1} parent=1 // loop_body
      %s29 = ssub.s32 %s24, 1
      %s30 = ssub.s32 %s24, 2
      %s31 = sadd.s32 %s24, 1
      %s32 = ssub.s32 %s24, %s31
      %p33 = scmp.eq.s32.totalorder %s32, 0
      %s35 = sadd.s32 %s34, 1
      %s36 = scalar_select %p33, %s34, %s35
      %p39 = pneg %p33
      %p40 = scmp.eq.s32.totalorder %s24, 1
      %p41 = por %p39, %p40
      %p42 = scmp.ne.s32.totalorder %s34, %s37
      %p43 = scmp.eq.s32.totalorder %s24, 0
      %p44 = por %p42, %p43
      %p45 = scmp.ne.s32.totalorder %s34, %s37
      %p46 = scmp.eq.s32.totalorder %s29, 1
      %p47 = por %p45, %p46
      %p48 = scmp.ne.s32.totalorder %s37, %s38
      %p49 = scmp.eq.s32.totalorder %s29, 0
      %p50 = por %p48, %p49
      %p51 = scmp.ne.s32.totalorder %s37, %s38
      %p52 = scmp.eq.s32.totalorder %s30, 1
      %p53 = por %p51, %p52
      %p55 = scmp.ne.s32.totalorder %s38, %s54
      %p56 = scmp.eq.s32.totalorder %s30, 0
      %p57 = por %p55, %p56
      %s59 = sadd.s32 %s58, 1
      %p62 = scmp.eq.s32.totalorder %s24, 1
      %p63 = scmp.ne.s32.totalorder %s58, %s60
      %p64 = scmp.eq.s32.totalorder %s24, 0
      %p65 = por %p63, %p64
      %p66 = scmp.ne.s32.totalorder %s58, %s60
      %p67 = scmp.eq.s32.totalorder %s29, 1
      %p68 = por %p66, %p67
      %p69 = scmp.ne.s32.totalorder %s60, %s61
      %p70 = scmp.eq.s32.totalorder %s29, 0
      %p71 = por %p69, %p70
      %p72 = scmp.ne.s32.totalorder %s60, %s61
      %p73 = scmp.eq.s32.totalorder %s30, 1
      %p74 = por %p72, %p73
      %p76 = scmp.ne.s32.totalorder %s61, %s75
      %p77 = scmp.eq.s32.totalorder %s30, 0
      %p78 = por %p76, %p77
      %s80 = sadd.s32 %s79, 1
      %p83 = scmp.eq.s32.totalorder %s24, 1
      %p84 = scmp.ne.s32.totalorder %s79, %s81
      %p85 = scmp.eq.s32.totalorder %s24, 0
      %p86 = por %p84, %p85
      %p87 = scmp.ne.s32.totalorder %s79, %s81
      %p88 = scmp.eq.s32.totalorder %s29, 1
      %p89 = por %p87, %p88
      %p90 = scmp.ne.s32.totalorder %s81, %s82
      %p91 = scmp.eq.s32.totalorder %s29, 0
      %p92 = por %p90, %p91
      %p93 = scmp.ne.s32.totalorder %s81, %s82
      %p94 = scmp.eq.s32.totalorder %s30, 1
      %p95 = por %p93, %p94
      %p97 = scmp.ne.s32.totalorder %s82, %s96
      %p98 = scmp.eq.s32.totalorder %s30, 0
      %p99 = por %p97, %p98
      %s101 = sadd.s32 %s100, 1
      %p104 = scmp.eq.s32.totalorder %s24, 1
      %p105 = scmp.ne.s32.totalorder %s100, %s102
      %p106 = scmp.eq.s32.totalorder %s24, 0
      %p107 = por %p105, %p106
      %p108 = scmp.ne.s32.totalorder %s100, %s102
      %p109 = scmp.eq.s32.totalorder %s29, 1
      %p110 = por %p108, %p109
      %p111 = scmp.ne.s32.totalorder %s102, %s103
      %p112 = scmp.eq.s32.totalorder %s29, 0
      %p113 = por %p111, %p112
      %p114 = scmp.ne.s32.totalorder %s102, %s103
      %p115 = scmp.eq.s32.totalorder %s30, 1
      %p116 = por %p114, %p115
      %p118 = scmp.ne.s32.totalorder %s103, %s117
      %p119 = scmp.eq.s32.totalorder %s30, 0
      %p120 = por %p118, %p119
      %s122 = sadd.s32 %s121, 1
      %p125 = scmp.eq.s32.totalorder %s24, 1
      %p126 = scmp.ne.s32.totalorder %s121, %s123
      %p127 = scmp.eq.s32.totalorder %s24, 0
      %p128 = por %p126, %p127
      %p129 = scmp.ne.s32.totalorder %s121, %s123
      %p130 = scmp.eq.s32.totalorder %s29, 1
      %p131 = por %p129, %p130
      %p132 = scmp.ne.s32.totalorder %s123, %s124
      %p133 = scmp.eq.s32.totalorder %s29, 0
      %p134 = por %p132, %p133
      %p135 = scmp.ne.s32.totalorder %s123, %s124
      %p136 = scmp.eq.s32.totalorder %s30, 1
      %p137 = por %p135, %p136
      %p139 = scmp.ne.s32.totalorder %s124, %s138
      %p140 = scmp.eq.s32.totalorder %s30, 0
      %p141 = por %p139, %p140
      %s143 = sadd.s32 %s142, 1
      %p146 = scmp.eq.s32.totalorder %s24, 1
      %p147 = scmp.ne.s32.totalorder %s142, %s144
      %p148 = scmp.eq.s32.totalorder %s24, 0
      %p149 = por %p147, %p148
      %p150 = scmp.ne.s32.totalorder %s142, %s144
      %p151 = scmp.eq.s32.totalorder %s29, 1
      %p152 = por %p150, %p151
      %p153 = scmp.ne.s32.totalorder %s144, %s145
      %p154 = scmp.eq.s32.totalorder %s29, 0
      %p155 = por %p153, %p154
      %p156 = scmp.ne.s32.totalorder %s144, %s145
      %p157 = scmp.eq.s32.totalorder %s30, 1
      %p158 = por %p156, %p157
      %p160 = scmp.ne.s32.totalorder %s145, %s159
      %p161 = scmp.eq.s32.totalorder %s30, 0
      %p162 = por %p160, %p161
      %s164 = sadd.s32 %s163, 1
      %p167 = scmp.eq.s32.totalorder %s24, 1
      %p168 = scmp.ne.s32.totalorder %s163, %s165
      %p169 = scmp.eq.s32.totalorder %s24, 0
      %p170 = por %p168, %p169
      %p171 = scmp.ne.s32.totalorder %s163, %s165
      %p172 = scmp.eq.s32.totalorder %s29, 1
      %p173 = por %p171, %p172
      %p174 = scmp.ne.s32.totalorder %s165, %s166
      %p175 = scmp.eq.s32.totalorder %s29, 0
      %p176 = por %p174, %p175
      %p177 = scmp.ne.s32.totalorder %s165, %s166
      %p178 = scmp.eq.s32.totalorder %s30, 1
      %p179 = por %p177, %p178
      %p181 = scmp.ne.s32.totalorder %s166, %s180
      %p182 = scmp.eq.s32.totalorder %s30, 0
      %p183 = por %p181, %p182
      %s185 = sadd.s32 %s184, 1
      %p188 = scmp.eq.s32.totalorder %s24, 1
      %p189 = scmp.ne.s32.totalorder %s184, %s186
      %p190 = scmp.eq.s32.totalorder %s24, 0
      %p191 = por %p189, %p190
      %p192 = scmp.ne.s32.totalorder %s184, %s186
      %p193 = scmp.eq.s32.totalorder %s29, 1
      %p194 = por %p192, %p193
      %p195 = scmp.ne.s32.totalorder %s186, %s187
      %p196 = scmp.eq.s32.totalorder %s29, 0
      %p197 = por %p195, %p196
      %p198 = scmp.ne.s32.totalorder %s186, %s187
      %p199 = scmp.eq.s32.totalorder %s30, 1
      %p200 = por %p198, %p199
      %p202 = scmp.ne.s32.totalorder %s187, %s201
      %p203 = scmp.eq.s32.totalorder %s30, 0
      %p204 = por %p202, %p203
      %s206 = sadd.s32 %s205, 1
      %p209 = scmp.eq.s32.totalorder %s24, 1
      %p210 = scmp.ne.s32.totalorder %s205, %s207
      %p211 = scmp.eq.s32.totalorder %s24, 0
      %p212 = por %p210, %p211
      %p213 = scmp.ne.s32.totalorder %s205, %s207
      %p214 = scmp.eq.s32.totalorder %s29, 1
      %p215 = por %p213, %p214
      %p216 = scmp.ne.s32.totalorder %s207, %s208
      %p217 = scmp.eq.s32.totalorder %s29, 0
      %p218 = por %p216, %p217
      %p219 = scmp.ne.s32.totalorder %s207, %s208
      %p220 = scmp.eq.s32.totalorder %s30, 1
      %p221 = por %p219, %p220
      %p223 = scmp.ne.s32.totalorder %s208, %s222
      %p224 = scmp.eq.s32.totalorder %s30, 0
      %p225 = por %p223, %p224
      %s227 = sadd.s32 %s226, 1
      %p230 = scmp.eq.s32.totalorder %s24, 1
      %p231 = scmp.ne.s32.totalorder %s226, %s228
      %p232 = scmp.eq.s32.totalorder %s24, 0
      %p233 = por %p231, %p232
      %p234 = scmp.ne.s32.totalorder %s226, %s228
      %p235 = scmp.eq.s32.totalorder %s29, 1
      %p236 = por %p234, %p235
      %p237 = scmp.ne.s32.totalorder %s228, %s229
      %p238 = scmp.eq.s32.totalorder %s29, 0
      %p239 = por %p237, %p238
      %p240 = scmp.ne.s32.totalorder %s228, %s229
      %p241 = scmp.eq.s32.totalorder %s30, 1
      %p242 = por %p240, %p241
      %p244 = scmp.ne.s32.totalorder %s229, %s243
      %p245 = scmp.eq.s32.totalorder %s30, 0
      %p246 = por %p244, %p245
      %s247 = ssub.s32 %s24, %s31
      %p248 = scmp.eq.s32.totalorder %s247, 0
      %s250 = sadd.s32 %s249, 1
      %s251 = scalar_select %p248, %s249, %s250
      %p254 = pneg %p248
      %p255 = scmp.eq.s32.totalorder %s24, 1
      %p256 = por %p254, %p255
      %p257 = scmp.ne.s32.totalorder %s249, %s252
      %p258 = scmp.eq.s32.totalorder %s24, 0
      %p259 = por %p257, %p258
      %p260 = scmp.ne.s32.totalorder %s249, %s252
      %p261 = scmp.eq.s32.totalorder %s29, 1
      %p262 = por %p260, %p261
      %p263 = scmp.ne.s32.totalorder %s252, %s253
      %p264 = scmp.eq.s32.totalorder %s29, 0
      %p265 = por %p263, %p264
      %p266 = scmp.ne.s32.totalorder %s252, %s253
      %p267 = scmp.eq.s32.totalorder %s30, 1
      %p268 = por %p266, %p267
      %p270 = scmp.ne.s32.totalorder %s253, %s269
      %p271 = scmp.eq.s32.totalorder %s30, 0
      %p272 = por %p270, %p271
      %p273 = scmp.le.s32.totalorder 1, %s24
      %p274 = scmp.lt.s32.totalorder %s24, 3
      %p275 = pnand %p273, %p274
      %p276 = pneg %p275
      // Predicated region
      $region9: #{tpu_custom_call.1} parent=5 // pred_check
        _
      $region10: #{tpu_custom_call.1} parent=5 // pred_check_branch
        %278 = sbr.rel (%p275) target = $region12
      $region11: #{tpu_custom_call.1} parent=5 // pred_region
        %s279 = ssub.s32 %s24, 1
        // Predicated region
        $region13: #{tpu_custom_call.1} parent=11 // pred_check
          %p280 = pneg %p71
        $region14: #{tpu_custom_call.1} parent=11 // pred_check_branch
          %282 = sbr.rel (%p280) target = $region16
        $region15: #{tpu_custom_call.1} parent=11 // pred_region
          _
        $region16: #{tpu_custom_call.1} parent=11 // pred_fallthru
          _
        // Predicated region
        $region17: #{tpu_custom_call.1} parent=11 // pred_check
          %p283 = pneg %p92
        $region18: #{tpu_custom_call.1} parent=11 // pred_check_branch
          %285 = sbr.rel (%p283) target = $region20
        $region19: #{tpu_custom_call.1} parent=11 // pred_region
          %287 = vsyncadd [#allocation6], 0
          %s288 = sshll.u32 %s2, 4
          %s289 = int_to_ptr.hbm [resolvable:$true] %s288
          %s290 = sshll.u32 [#allocation5], 4
          %s291 = int_to_ptr.vmem [resolvable:$true] %s290
          %296 = dma.hbm_to_vmem [thread:$0]  %s289, 4096, %s291, [#allocation6], 256, 256, 16
        $region20: #{tpu_custom_call.1} parent=11 // pred_fallthru
          _
        // Predicated region
        $region21: #{tpu_custom_call.1} parent=11 // pred_check
          %p297 = pneg %p113
        $region22: #{tpu_custom_call.1} parent=11 // pred_check_branch
          %299 = sbr.rel (%p297) target = $region24
        $region23: #{tpu_custom_call.1} parent=11 // pred_region
          _
        $region24: #{tpu_custom_call.1} parent=11 // pred_fallthru
          _
        // Predicated region
        $region25: #{tpu_custom_call.1} parent=11 // pred_check
          %p300 = pneg %p134
        $region26: #{tpu_custom_call.1} parent=11 // pred_check_branch
          %302 = sbr.rel (%p300) target = $region28
        $region27: #{tpu_custom_call.1} parent=11 // pred_region
          _
        $region28: #{tpu_custom_call.1} parent=11 // pred_fallthru
          _
        // Predicated region
        $region29: #{tpu_custom_call.1} parent=11 // pred_check
          %p303 = pneg %p155
        $region30: #{tpu_custom_call.1} parent=11 // pred_check_branch
          %305 = sbr.rel (%p303) target = $region32
        $region31: #{tpu_custom_call.1} parent=11 // pred_region
          %307 = vsyncadd [#allocation6], 0
          %s309 = sshll.u32 %s5, 4
          %s310 = int_to_ptr.hbm [resolvable:$true] %s309
          %s311 = sshll.u32 [#allocation7], 4
          %s312 = int_to_ptr.vmem [resolvable:$true] %s311
          %314 = dma.hbm_to_vmem [thread:$0]  %s310, 16, %s312, [#allocation6]
        $region32: #{tpu_custom_call.1} parent=11 // pred_fallthru
          _
        // Predicated region
        $region33: #{tpu_custom_call.1} parent=11 // pred_check
          %p315 = pneg %p176
        $region34: #{tpu_custom_call.1} parent=11 // pred_check_branch
          %317 = sbr.rel (%p315) target = $region36
        $region35: #{tpu_custom_call.1} parent=11 // pred_region
          _
        $region36: #{tpu_custom_call.1} parent=11 // pred_fallthru
          _
        // Predicated region
        $region37: #{tpu_custom_call.1} parent=11 // pred_check
          %p318 = pneg %p197
        $region38: #{tpu_custom_call.1} parent=11 // pred_check_branch
          %320 = sbr.rel (%p318) target = $region40
        $region39: #{tpu_custom_call.1} parent=11 // pred_region
          _
        $region40: #{tpu_custom_call.1} parent=11 // pred_fallthru
          _
        // Predicated region
        $region41: #{tpu_custom_call.1} parent=11 // pred_check
          %p321 = pneg %p218
        $region42: #{tpu_custom_call.1} parent=11 // pred_check_branch
          %323 = sbr.rel (%p321) target = $region44
        $region43: #{tpu_custom_call.1} parent=11 // pred_region
          %325 = vsyncadd [#allocation9], 0
          %s326 = sshll.u32 %s8, 4
          %s327 = int_to_ptr.hbm [resolvable:$true] %s326
          %s328 = sshll.u32 [#allocation8], 4
          %s329 = int_to_ptr.vmem [resolvable:$true] %s328
          %334 = dma.hbm_to_vmem [thread:$0]  %s327, 1024, %s329, [#allocation9], 128, 128, 8
        $region44: #{tpu_custom_call.1} parent=11 // pred_fallthru
          _
        // Predicated region
        $region45: #{tpu_custom_call.1} parent=11 // pred_check
          %p335 = pneg %p239
        $region46: #{tpu_custom_call.1} parent=11 // pred_check_branch
          %337 = sbr.rel (%p335) target = $region48
        $region47: #{tpu_custom_call.1} parent=11 // pred_region
          _
        $region48: #{tpu_custom_call.1} parent=11 // pred_fallthru
          _
      $region12: #{tpu_custom_call.1} parent=5 // pred_fallthru
        _
      %p338 = scmp.lt.s32.totalorder %s24, 2
      // Predicated region
      $region49: #{tpu_custom_call.1} parent=5 // pred_check
        %p339 = pneg %p338
      $region50: #{tpu_custom_call.1} parent=5 // pred_check_branch
        %341 = sbr.rel (%p339) target = $region52
      $region51: #{tpu_custom_call.1} parent=5 // pred_region
        // Predicated region
        $region53: #{tpu_custom_call.1} parent=51 // pred_check
          %p342 = pneg %p44
        $region54: #{tpu_custom_call.1} parent=51 // pred_check_branch
          %344 = sbr.rel (%p342) target = $region56
        $region55: #{tpu_custom_call.1} parent=51 // pred_region
          %s345 = sand.u32 %s34, 1
          %s346 = scalar_lea.sflag [#allocation3], %s345
          %s347 = sand.u32 %s34, 1
          %s348 = smul.addr %s347, 128
          %s349 = scalar_lea.vmem [#allocation2], %s348
          %351 = vsyncadd %s346, 0
          %s352 = smul.addr %s24, 2
          %s353 = smul.addr %s352, 8
          %s354 = scalar_lea.hbm %s0, %s353
          %s355 = sshll.u32 %s354, 4
          %s356 = int_to_ptr.hbm [resolvable:$true] %s355
          %s357 = sshll.u32 %s349, 4
          %s358 = int_to_ptr.vmem [resolvable:$true] %s357
          %363 = dma.hbm_to_vmem [thread:$0]  %s356, 2048, %s358, %s346, 512, 256, 16
        $region56: #{tpu_custom_call.1} parent=51 // pred_fallthru
          _
      $region52: #{tpu_custom_call.1} parent=5 // pred_fallthru
        _
      %p364 = scmp.le.s32.totalorder 1, %s24
      %p365 = scmp.lt.s32.totalorder %s24, 3
      %p366 = pnand %p364, %p365
      %p367 = pneg %p366
      // Predicated region
      $region57: #{tpu_custom_call.1} parent=5 // pred_check
        _
      $region58: #{tpu_custom_call.1} parent=5 // pred_check_branch
        %369 = sbr.rel (%p366) target = $region60
      $region59: #{tpu_custom_call.1} parent=5 // pred_region
        %s370 = ssub.s32 %s24, 1
        %s371 = sand.u32 %s37, 1
        %s372 = scalar_lea.sflag [#allocation3], %s371
        %s373 = sand.u32 %s37, 1
        %s374 = smul.addr %s373, 128
        %s375 = scalar_lea.vmem [#allocation2], %s374
        // Predicated region
        $region61: #{tpu_custom_call.1} parent=59 // pred_check
          %p376 = pneg %p50
        $region62: #{tpu_custom_call.1} parent=59 // pred_check_branch
          %378 = sbr.rel (%p376) target = $region64
        $region63: #{tpu_custom_call.1} parent=59 // pred_region
          %380 = dma.done %s372, 2048
        $region64: #{tpu_custom_call.1} parent=59 // pred_fallthru
          _
        // Predicated region
        $region65: #{tpu_custom_call.1} parent=59 // pred_check
          %p381 = pneg %p92
        $region66: #{tpu_custom_call.1} parent=59 // pred_check_branch
          %383 = sbr.rel (%p381) target = $region68
        $region67: #{tpu_custom_call.1} parent=59 // pred_region
          %385 = dma.done [#allocation6], 4096
        $region68: #{tpu_custom_call.1} parent=59 // pred_fallthru
          _
        // Predicated region
        $region69: #{tpu_custom_call.1} parent=59 // pred_check
          %p386 = pneg %p155
        $region70: #{tpu_custom_call.1} parent=59 // pred_check_branch
          %388 = sbr.rel (%p386) target = $region72
        $region71: #{tpu_custom_call.1} parent=59 // pred_region
          %390 = dma.done [#allocation6], 16
        $region72: #{tpu_custom_call.1} parent=59 // pred_fallthru
          _
        // Predicated region
        $region73: #{tpu_custom_call.1} parent=59 // pred_check
          %p391 = pneg %p218
        $region74: #{tpu_custom_call.1} parent=59 // pred_check_branch
          %393 = sbr.rel (%p391) target = $region76
        $region75: #{tpu_custom_call.1} parent=59 // pred_region
          %395 = dma.done [#allocation9], 1024
        $region76: #{tpu_custom_call.1} parent=59 // pred_fallthru
          _
        %s396 = sand.u32 %s37, 1
        %s397 = scalar_lea.sflag [#allocation3], %s396
        %s398 = sand.u32 %s37, 1
        %s399 = smul.addr %s398, 128
        %s400 = scalar_lea.vmem [#allocation2], %s399
        %p401 = pneg %p50
        %p402 = pneg %p47
        %p403 = pneg %p71
        %p404 = pneg %p68
        %p405 = pneg %p92
        %p406 = pneg %p89
        %p407 = pneg %p113
        %p408 = pneg %p110
        %p409 = pneg %p134
        %p410 = pneg %p131
        %p411 = pneg %p155
        %p412 = pneg %p152
        %p413 = pneg %p176
        %p414 = pneg %p173
        %p415 = pneg %p197
        %p416 = pneg %p194
        %p417 = pneg %p218
        %p418 = pneg %p215
        %p419 = pneg %p239
        %p420 = pneg %p236
        %p421 = pneg %p265
        %p422 = pneg %p262
        %s423 = sand.u32 %s252, 1
        %s424 = scalar_lea.sflag [#allocation4], %s423
        %s425 = sand.u32 %s252, 1
        %s426 = smul.addr %s425, 8
        %s427 = scalar_lea.vmem [#allocation10], %s426
        %v428 = vld [vmem:[%s1] sm:$0xff]
        %v429 = vld [vmem:[%s1 + $0x8] sm:$0xff]
        %v430 = vld [vmem:[%s1 + $0x10] sm:$0xff]
        %v431 = vld [vmem:[%s1 + $0x18] sm:$0xff]
        %v432 = vld [vmem:[%s1 + $0x20] sm:$0xff]
        %v433 = vld [vmem:[%s1 + $0x28] sm:$0xff]
        %v434 = vld [vmem:[%s1 + $0x30] sm:$0xff]
        %v435 = vld [vmem:[%s1 + $0x38] sm:$0xff]
        %v436 = vld [vmem:[%s1 + $0x40] sm:$0xff]
        %v437 = vld [vmem:[%s1 + $0x48] sm:$0xff]
        %v438 = vld [vmem:[%s1 + $0x50] sm:$0xff]
        %v439 = vld [vmem:[%s1 + $0x58] sm:$0xff]
        %v440 = vld [vmem:[%s1 + $0x60] sm:$0xff]
        %v441 = vld [vmem:[%s1 + $0x68] sm:$0xff]
        %v442 = vld [vmem:[%s1 + $0x70] sm:$0xff]
        %v443 = vld [vmem:[%s1 + $0x78] sm:$0xff]
        %v444 = vld [vmem:[#allocation5] sm:$0xff]
        %v445 = vld [vmem:[#allocation5 + $0x8] sm:$0xff]
        %v446 = vld [vmem:[#allocation5 + $0x10] sm:$0xff]
        %v447 = vld [vmem:[#allocation5 + $0x18] sm:$0xff]
        %v448 = vld [vmem:[#allocation5 + $0x20] sm:$0xff]
        %v449 = vld [vmem:[#allocation5 + $0x28] sm:$0xff]
        %v450 = vld [vmem:[#allocation5 + $0x30] sm:$0xff]
        %v451 = vld [vmem:[#allocation5 + $0x38] sm:$0xff]
        %v452 = vld [vmem:[#allocation5 + $0x40] sm:$0xff]
        %v453 = vld [vmem:[#allocation5 + $0x48] sm:$0xff]
        %v454 = vld [vmem:[#allocation5 + $0x50] sm:$0xff]
        %v455 = vld [vmem:[#allocation5 + $0x58] sm:$0xff]
        %v456 = vld [vmem:[#allocation5 + $0x60] sm:$0xff]
        %v457 = vld [vmem:[#allocation5 + $0x68] sm:$0xff]
        %v458 = vld [vmem:[#allocation5 + $0x70] sm:$0xff]
        %v459 = vld [vmem:[#allocation5 + $0x78] sm:$0xff]
        %v460 = vld [vmem:[#allocation5 + $0x80] sm:$0xff]
        %v461 = vld [vmem:[#allocation5 + $0x88] sm:$0xff]
        %v462 = vld [vmem:[#allocation5 + $0x90] sm:$0xff]
        %v463 = vld [vmem:[#allocation5 + $0x98] sm:$0xff]
        %v464 = vld [vmem:[#allocation5 + $0xa0] sm:$0xff]
        %v465 = vld [vmem:[#allocation5 + $0xa8] sm:$0xff]
        %v466 = vld [vmem:[#allocation5 + $0xb0] sm:$0xff]
        %v467 = vld [vmem:[#allocation5 + $0xb8] sm:$0xff]
        %v468 = vld [vmem:[#allocation5 + $0xc0] sm:$0xff]
        %v469 = vld [vmem:[#allocation5 + $0xc8] sm:$0xff]
        %v470 = vld [vmem:[#allocation5 + $0xd0] sm:$0xff]
        %v471 = vld [vmem:[#allocation5 + $0xd8] sm:$0xff]
        %v472 = vld [vmem:[#allocation5 + $0xe0] sm:$0xff]
        %v473 = vld [vmem:[#allocation5 + $0xe8] sm:$0xff]
        %v474 = vld [vmem:[#allocation5 + $0xf0] sm:$0xff]
        %v475 = vld [vmem:[#allocation5 + $0xf8] sm:$0xff]
        %v476 = vld [vmem:[%s375] sm:$0xff]
        %v477 = vld [vmem:[%s375 + $0x8] sm:$0xff]
        %vm478 = vcmask 523264
        %v480 = vsel %vm478, 0.0, 0
        %482 = vmatpush.msra.mxu0 0.0
        %483 = vmatpush.msra.mxu0 0.0
        %484 = vmatpush.msra.mxu0 0.0
        %485 = vmatpush.msra.mxu0 0.0
        %486 = vmatpush.msra.mxu0 0.0
        %487 = vmatpush.msra.mxu0 0.0
        %488 = vmatpush.msra.mxu0 0.0
        %489 = vmatpush.msra.mxu0 0.0
        %490 = vmatpush.msra.mxu0 %v442
        %491 = vmatpush.msra.mxu0 %v440
        %492 = vmatpush.msra.mxu0 %v438
        %493 = vmatpush.msra.mxu0 %v436
        %494 = vmatpush.msra.mxu0 %v434
        %495 = vmatpush.msra.mxu0 %v432
        %496 = vmatpush.msra.mxu0 %v430
        %497 = vmatpush.msra.mxu0 %v428
        %498 = vmatmul.f32.gmra.mxu0 %v480
        %v499 = vpop.f32.mrf.mxu0
        %v500 = vadd.f32 %v476, %v499
        %501 = vdwg.mxu0
        %502 = vmatpush.msra.mxu0 0.0
        %503 = vmatpush.msra.mxu0 0.0
        %504 = vmatpush.msra.mxu0 0.0
        %505 = vmatpush.msra.mxu0 0.0
        %506 = vmatpush.msra.mxu0 0.0
        %507 = vmatpush.msra.mxu0 0.0
        %508 = vmatpush.msra.mxu0 0.0
        %509 = vmatpush.msra.mxu0 0.0
        %510 = vmatpush.msra.mxu0 %v443
        %511 = vmatpush.msra.mxu0 %v441
        %512 = vmatpush.msra.mxu0 %v439
        %513 = vmatpush.msra.mxu0 %v437
        %514 = vmatpush.msra.mxu0 %v435
        %515 = vmatpush.msra.mxu0 %v433
        %516 = vmatpush.msra.mxu0 %v431
        %517 = vmatpush.msra.mxu0 %v429
        %518 = vmatmul.f32.gmra.mxu0 %v480
        %v519 = vpop.f32.mrf.mxu0
        %v520 = vadd.f32 %v477, %v519
        %521 = vdwg.mxu0
        %v522 = vxor.u32 %v500, 2147483648
        %v523 = vmul.f32 %v522, 1.442695
        %v524 = vpow.pop %v523
        %v525 = vadd.f32 %v524, 1.0
        %v526 = vrcp.pop %v525
        %v527 = vmul.f32 %v525, %v526
        %v528 = vsub.f32 1.0, %v527
        %v529 = vmul.f32 %v526, %v528
        %v530 = vadd.f32 %v526, %v529
        %vm531 = vweird.f32 %v525
        %vm532 = vweird.f32 %v526
        %vm533 = vmor %vm531, %vm532
        %v534 = vsel %vm533, %v526, %v530
        %v535 = vand.u32 2147483647, %v525
        %vm536 = vcmp.eq.f32.partialorder %v535, 8.507059e+37
        %v537 = vand.u32 %v525, 2147483648
        %v538 = vor.u32 1.1754944e-38, %v537
        %v539 = vsel %vm536, %v538, %v534
        %v540 = vmul.f32 1.0, %v539
        %v541 = vtanh.pop %v520
        %v542 = vxor.u32 %v520, 2147483648
        %v543 = vmul.f32 %v542, 1.442695
        %v544 = vpow.pop %v543
        %v545 = vadd.f32 %v544, 1.0
        %v546 = vrcp.pop %v545
        %v547 = vmul.f32 %v545, %v546
        %v548 = vsub.f32 1.0, %v547
        %v549 = vmul.f32 %v546, %v548
        %v550 = vadd.f32 %v546, %v549
        %vm551 = vweird.f32 %v545
        %vm552 = vweird.f32 %v546
        %vm553 = vmor %vm551, %vm552
        %v554 = vsel %vm553, %v546, %v550
        %v555 = vand.u32 2147483647, %v545
        %vm556 = vcmp.eq.f32.partialorder %v555, 8.507059e+37
        %v557 = vand.u32 %v545, 2147483648
        %v558 = vor.u32 1.1754944e-38, %v557
        %v559 = vsel %vm556, %v558, %v554
        %v560 = vmul.f32 1.0, %v559
        %v561 = vmul.f32 %v540, 0.0
        %v562 = vmul.f32 %v540, %v541
        %564 = vrot.lane.b32.xlu0 %v562, 64
        %v565 = vpop.permute.xlu0 %564
        %v567 = vadd.f32 %v561, %v565
        %v568 = vtanh.pop %v567
        %v569 = vmul.f32 %v560, %v568
        %571 = vrot.lane.b32.xlu0 %v569, 64
        %v572 = vpop.permute.xlu0 %571
        %v574 = vsel %vm478, %v572, 0.0
        %v575 = vld [vmem:[%s3] sm:$0x3]
        %v577 = vperm.slane %v575, 0
        %v578 = vperm.slane %v575, 1
        %581 = vmatpush.msra.mxu0 %v474
        %582 = vmatpush.msra.mxu0 %v472
        %583 = vmatpush.msra.mxu0 %v470
        %584 = vmatpush.msra.mxu0 %v468
        %585 = vmatpush.msra.mxu0 %v466
        %586 = vmatpush.msra.mxu0 %v464
        %587 = vmatpush.msra.mxu0 %v462
        %588 = vmatpush.msra.mxu0 %v460
        %589 = vmatpush.msra.mxu0 %v458
        %590 = vmatpush.msra.mxu0 %v456
        %591 = vmatpush.msra.mxu0 %v454
        %592 = vmatpush.msra.mxu0 %v452
        %593 = vmatpush.msra.mxu0 %v450
        %594 = vmatpush.msra.mxu0 %v448
        %595 = vmatpush.msra.mxu0 %v446
        %596 = vmatpush.msra.mxu0 %v444
        %597 = vmatmul.f32.gmra.mxu0 %v574
        %v598 = vpop.f32.mrf.mxu0
        %v599 = vadd.f32 %v577, %v598
        %600 = vdwg.mxu0
        %601 = vmatpush.msra.mxu0 %v475
        %602 = vmatpush.msra.mxu0 %v473
        %603 = vmatpush.msra.mxu0 %v471
        %604 = vmatpush.msra.mxu0 %v469
        %605 = vmatpush.msra.mxu0 %v467
        %606 = vmatpush.msra.mxu0 %v465
        %607 = vmatpush.msra.mxu0 %v463
        %608 = vmatpush.msra.mxu0 %v461
        %609 = vmatpush.msra.mxu0 %v459
        %610 = vmatpush.msra.mxu0 %v457
        %611 = vmatpush.msra.mxu0 %v455
        %612 = vmatpush.msra.mxu0 %v453
        %613 = vmatpush.msra.mxu0 %v451
        %614 = vmatpush.msra.mxu0 %v449
        %615 = vmatpush.msra.mxu0 %v447
        %616 = vmatpush.msra.mxu0 %v445
        %617 = vmatmul.f32.gmra.mxu0 %v574
        %v618 = vpop.f32.mrf.mxu0
        %v619 = vadd.f32 %v578, %v618
        %620 = vdwg.mxu0
        %v621 = vxor.u32 %v599, 2147483648
        %v622 = vmul.f32 %v621, 1.442695
        %v623 = vpow.pop %v622
        %v624 = vadd.f32 %v623, 1.0
        %v625 = vrcp.pop %v624
        %v626 = vmul.f32 %v624, %v625
        %v627 = vsub.f32 1.0, %v626
        %v628 = vmul.f32 %v625, %v627
        %v629 = vadd.f32 %v625, %v628
        %vm630 = vweird.f32 %v624
        %vm631 = vweird.f32 %v625
        %vm632 = vmor %vm630, %vm631
        %v633 = vsel %vm632, %v625, %v629
        %v634 = vand.u32 2147483647, %v624
        %vm635 = vcmp.eq.f32.partialorder %v634, 8.507059e+37
        %v636 = vand.u32 %v624, 2147483648
        %v637 = vor.u32 1.1754944e-38, %v636
        %v638 = vsel %vm635, %v637, %v633
        %v639 = vmul.f32 1.0, %v638
        %v640 = vtanh.pop %v619
        %v641 = vxor.u32 %v619, 2147483648
        %v642 = vmul.f32 %v641, 1.442695
        %v643 = vpow.pop %v642
        %v644 = vadd.f32 %v643, 1.0
        %v645 = vrcp.pop %v644
        %v646 = vmul.f32 %v644, %v645
        %v647 = vsub.f32 1.0, %v646
        %v648 = vmul.f32 %v645, %v647
        %v649 = vadd.f32 %v645, %v648
        %vm650 = vweird.f32 %v644
        %vm651 = vweird.f32 %v645
        %vm652 = vmor %vm650, %vm651
        %v653 = vsel %vm652, %v645, %v649
        %v654 = vand.u32 2147483647, %v644
        %vm655 = vcmp.eq.f32.partialorder %v654, 8.507059e+37
        %v656 = vand.u32 %v644, 2147483648
        %v657 = vor.u32 1.1754944e-38, %v656
        %v658 = vsel %vm655, %v657, %v653
        %v659 = vmul.f32 1.0, %v658
        %v660 = vmul.f32 %v639, 0.0
        %v661 = vmul.f32 %v639, %v640
        %663 = vrot.lane.b32.xlu0 %v661, 64
        %v664 = vpop.permute.xlu0 %663
        %v666 = vadd.f32 %v660, %v664
        %v667 = vtanh.pop %v666
        %v668 = vmul.f32 %v659, %v667
        %s669 = scalar_lea.vmem %s375, 16 [#allocation2]
        %v670 = vld [vmem:[%s669] sm:$0xff]
        %v671 = vld [vmem:[%s669 + $0x8] sm:$0xff]
        %v672 = vsel %vm478, %v572, 0
        %674 = vmatpush.msra.mxu0 0.0
        %675 = vmatpush.msra.mxu0 0.0
        %676 = vmatpush.msra.mxu0 0.0
        %677 = vmatpush.msra.mxu0 0.0
        %678 = vmatpush.msra.mxu0 0.0
        %679 = vmatpush.msra.mxu0 0.0
        %680 = vmatpush.msra.mxu0 0.0
        %681 = vmatpush.msra.mxu0 0.0
        %682 = vmatpush.msra.mxu0 %v442
        %683 = vmatpush.msra.mxu0 %v440
        %684 = vmatpush.msra.mxu0 %v438
        %685 = vmatpush.msra.mxu0 %v436
        %686 = vmatpush.msra.mxu0 %v434
        %687 = vmatpush.msra.mxu0 %v432
        %688 = vmatpush.msra.mxu0 %v430
        %689 = vmatpush.msra.mxu0 %v428
        %690 = vmatmul.f32.gmra.mxu0 %v672
        %v691 = vpop.f32.mrf.mxu0
        %v692 = vadd.f32 %v670, %v691
        %693 = vdwg.mxu0
        %694 = vmatpush.msra.mxu0 0.0
        %695 = vmatpush.msra.mxu0 0.0
        %696 = vmatpush.msra.mxu0 0.0
        %697 = vmatpush.msra.mxu0 0.0
        %698 = vmatpush.msra.mxu0 0.0
        %699 = vmatpush.msra.mxu0 0.0
        %700 = vmatpush.msra.mxu0 0.0
        %701 = vmatpush.msra.mxu0 0.0
        %702 = vmatpush.msra.mxu0 %v443
        %703 = vmatpush.msra.mxu0 %v441
        %704 = vmatpush.msra.mxu0 %v439
        %705 = vmatpush.msra.mxu0 %v437
        %706 = vmatpush.msra.mxu0 %v435
        %707 = vmatpush.msra.mxu0 %v433
        %708 = vmatpush.msra.mxu0 %v431
        %709 = vmatpush.msra.mxu0 %v429
        %710 = vmatmul.f32.gmra.mxu0 %v672
        %v711 = vpop.f32.mrf.mxu0
        %v712 = vadd.f32 %v671, %v711
        %713 = vdwg.mxu0
        %v714 = vxor.u32 %v692, 2147483648
        %v715 = vmul.f32 %v714, 1.442695
        %v716 = vpow.pop %v715
        %v717 = vadd.f32 %v716, 1.0
        %v718 = vrcp.pop %v717
        %v719 = vmul.f32 %v717, %v718
        %v720 = vsub.f32 1.0, %v719
        %v721 = vmul.f32 %v718, %v720
        %v722 = vadd.f32 %v718, %v721
        %vm723 = vweird.f32 %v717
        %vm724 = vweird.f32 %v718
        %vm725 = vmor %vm723, %vm724
        %v726 = vsel %vm725, %v718, %v722
        %v727 = vand.u32 2147483647, %v717
        %vm728 = vcmp.eq.f32.partialorder %v727, 8.507059e+37
        %v729 = vand.u32 %v717, 2147483648
        %v730 = vor.u32 1.1754944e-38, %v729
        %v731 = vsel %vm728, %v730, %v726
        %v732 = vmul.f32 1.0, %v731
        %v733 = vtanh.pop %v712
        %v734 = vxor.u32 %v712, 2147483648
        %v735 = vmul.f32 %v734, 1.442695
        %v736 = vpow.pop %v735
        %v737 = vadd.f32 %v736, 1.0
        %v738 = vrcp.pop %v737
        %v739 = vmul.f32 %v737, %v738
        %v740 = vsub.f32 1.0, %v739
        %v741 = vmul.f32 %v738, %v740
        %v742 = vadd.f32 %v738, %v741
        %vm743 = vweird.f32 %v737
        %vm744 = vweird.f32 %v738
        %vm745 = vmor %vm743, %vm744
        %v746 = vsel %vm745, %v738, %v742
        %v747 = vand.u32 2147483647, %v737
        %vm748 = vcmp.eq.f32.partialorder %v747, 8.507059e+37
        %v749 = vand.u32 %v737, 2147483648
        %v750 = vor.u32 1.1754944e-38, %v749
        %v751 = vsel %vm748, %v750, %v746
        %v752 = vmul.f32 1.0, %v751
        %v753 = vmul.f32 %v732, %v567
        %v754 = vmul.f32 %v732, %v733
        %756 = vrot.lane.b32.xlu0 %v754, 64
        %v757 = vpop.permute.xlu0 %756
        %v759 = vadd.f32 %v753, %v757
        %v760 = vtanh.pop %v759
        %v761 = vmul.f32 %v752, %v760
        %763 = vrot.lane.b32.xlu0 %v761, 64
        %v764 = vpop.permute.xlu0 %763
        %v766 = vsel %vm478, %v764, %v668
        %767 = vmatpush.msra.mxu0 %v474
        %768 = vmatpush.msra.mxu0 %v472
        %769 = vmatpush.msra.mxu0 %v470
        %770 = vmatpush.msra.mxu0 %v468
        %771 = vmatpush.msra.mxu0 %v466
        %772 = vmatpush.msra.mxu0 %v464
        %773 = vmatpush.msra.mxu0 %v462
        %774 = vmatpush.msra.mxu0 %v460
        %775 = vmatpush.msra.mxu0 %v458
        %776 = vmatpush.msra.mxu0 %v456
        %777 = vmatpush.msra.mxu0 %v454
        %778 = vmatpush.msra.mxu0 %v452
        %779 = vmatpush.msra.mxu0 %v450
        %780 = vmatpush.msra.mxu0 %v448
        %781 = vmatpush.msra.mxu0 %v446
        %782 = vmatpush.msra.mxu0 %v444
        %783 = vmatmul.f32.gmra.mxu0 %v766
        %v784 = vpop.f32.mrf.mxu0
        %v785 = vadd.f32 %v577, %v784
        %786 = vdwg.mxu0
        %787 = vmatpush.msra.mxu0 %v475
        %788 = vmatpush.msra.mxu0 %v473
        %789 = vmatpush.msra.mxu0 %v471
        %790 = vmatpush.msra.mxu0 %v469
        %791 = vmatpush.msra.mxu0 %v467
        %792 = vmatpush.msra.mxu0 %v465
        %793 = vmatpush.msra.mxu0 %v463
        %794 = vmatpush.msra.mxu0 %v461
        %795 = vmatpush.msra.mxu0 %v459
        %796 = vmatpush.msra.mxu0 %v457
        %797 = vmatpush.msra.mxu0 %v455
        %798 = vmatpush.msra.mxu0 %v453
        %799 = vmatpush.msra.mxu0 %v451
        %800 = vmatpush.msra.mxu0 %v449
        %801 = vmatpush.msra.mxu0 %v447
        %802 = vmatpush.msra.mxu0 %v445
        %803 = vmatmul.f32.gmra.mxu0 %v766
        %v804 = vpop.f32.mrf.mxu0
        %v805 = vadd.f32 %v578, %v804
        %806 = vdwg.mxu0
        %v807 = vxor.u32 %v785, 2147483648
        %v808 = vmul.f32 %v807, 1.442695
        %v809 = vpow.pop %v808
        %v810 = vadd.f32 %v809, 1.0
        %v811 = vrcp.pop %v810
        %v812 = vmul.f32 %v810, %v811
        %v813 = vsub.f32 1.0, %v812
        %v814 = vmul.f32 %v811, %v813
        %v815 = vadd.f32 %v811, %v814
        %vm816 = vweird.f32 %v810
        %vm817 = vweird.f32 %v811
        %vm818 = vmor %vm816, %vm817
        %v819 = vsel %vm818, %v811, %v815
        %v820 = vand.u32 2147483647, %v810
        %vm821 = vcmp.eq.f32.partialorder %v820, 8.507059e+37
        %v822 = vand.u32 %v810, 2147483648
        %v823 = vor.u32 1.1754944e-38, %v822
        %v824 = vsel %vm821, %v823, %v819
        %v825 = vmul.f32 1.0, %v824
        %v826 = vtanh.pop %v805
        %v827 = vxor.u32 %v805, 2147483648
        %v828 = vmul.f32 %v827, 1.442695
        %v829 = vpow.pop %v828
        %v830 = vadd.f32 %v829, 1.0
        %v831 = vrcp.pop %v830
        %v832 = vmul.f32 %v830, %v831
        %v833 = vsub.f32 1.0, %v832
        %v834 = vmul.f32 %v831, %v833
        %v835 = vadd.f32 %v831, %v834
        %vm836 = vweird.f32 %v830
        %vm837 = vweird.f32 %v831
        %vm838 = vmor %vm836, %vm837
        %v839 = vsel %vm838, %v831, %v835
        %v840 = vand.u32 2147483647, %v830
        %vm841 = vcmp.eq.f32.partialorder %v840, 8.507059e+37
        %v842 = vand.u32 %v830, 2147483648
        %v843 = vor.u32 1.1754944e-38, %v842
        %v844 = vsel %vm841, %v843, %v839
        %v845 = vmul.f32 1.0, %v844
        %v846 = vmul.f32 %v825, %v666
        %v847 = vmul.f32 %v825, %v826
        %849 = vrot.lane.b32.xlu0 %v847, 64
        %v850 = vpop.permute.xlu0 %849
        %v852 = vadd.f32 %v846, %v850
        %v853 = vtanh.pop %v852
        %v854 = vmul.f32 %v845, %v853
        %s855 = scalar_lea.vmem %s375, 32 [#allocation2]
        %v856 = vld [vmem:[%s855] sm:$0xff]
        %v857 = vld [vmem:[%s855 + $0x8] sm:$0xff]
        %v858 = vsel %vm478, %v764, 0
        %860 = vmatpush.msra.mxu0 0.0
        %861 = vmatpush.msra.mxu0 0.0
        %862 = vmatpush.msra.mxu0 0.0
        %863 = vmatpush.msra.mxu0 0.0
        %864 = vmatpush.msra.mxu0 0.0
        %865 = vmatpush.msra.mxu0 0.0
        %866 = vmatpush.msra.mxu0 0.0
        %867 = vmatpush.msra.mxu0 0.0
        %868 = vmatpush.msra.mxu0 %v442
        %869 = vmatpush.msra.mxu0 %v440
        %870 = vmatpush.msra.mxu0 %v438
        %871 = vmatpush.msra.mxu0 %v436
        %872 = vmatpush.msra.mxu0 %v434
        %873 = vmatpush.msra.mxu0 %v432
        %874 = vmatpush.msra.mxu0 %v430
        %875 = vmatpush.msra.mxu0 %v428
        %876 = vmatmul.f32.gmra.mxu0 %v858
        %v877 = vpop.f32.mrf.mxu0
        %v878 = vadd.f32 %v856, %v877
        %879 = vdwg.mxu0
        %880 = vmatpush.msra.mxu0 0.0
        %881 = vmatpush.msra.mxu0 0.0
        %882 = vmatpush.msra.mxu0 0.0
        %883 = vmatpush.msra.mxu0 0.0
        %884 = vmatpush.msra.mxu0 0.0
        %885 = vmatpush.msra.mxu0 0.0
        %886 = vmatpush.msra.mxu0 0.0
        %887 = vmatpush.msra.mxu0 0.0
        %888 = vmatpush.msra.mxu0 %v443
        %889 = vmatpush.msra.mxu0 %v441
        %890 = vmatpush.msra.mxu0 %v439
        %891 = vmatpush.msra.mxu0 %v437
        %892 = vmatpush.msra.mxu0 %v435
        %893 = vmatpush.msra.mxu0 %v433
        %894 = vmatpush.msra.mxu0 %v431
        %895 = vmatpush.msra.mxu0 %v429
        %896 = vmatmul.f32.gmra.mxu0 %v858
        %v897 = vpop.f32.mrf.mxu0
        %v898 = vadd.f32 %v857, %v897
        %899 = vdwg.mxu0
        %v900 = vxor.u32 %v878, 2147483648
        %v901 = vmul.f32 %v900, 1.442695
        %v902 = vpow.pop %v901
        %v903 = vadd.f32 %v902, 1.0
        %v904 = vrcp.pop %v903
        %v905 = vmul.f32 %v903, %v904
        %v906 = vsub.f32 1.0, %v905
        %v907 = vmul.f32 %v904, %v906
        %v908 = vadd.f32 %v904, %v907
        %vm909 = vweird.f32 %v903
        %vm910 = vweird.f32 %v904
        %vm911 = vmor %vm909, %vm910
        %v912 = vsel %vm911, %v904, %v908
        %v913 = vand.u32 2147483647, %v903
        %vm914 = vcmp.eq.f32.partialorder %v913, 8.507059e+37
        %v915 = vand.u32 %v903, 2147483648
        %v916 = vor.u32 1.1754944e-38, %v915
        %v917 = vsel %vm914, %v916, %v912
        %v918 = vmul.f32 1.0, %v917
        %v919 = vtanh.pop %v898
        %v920 = vxor.u32 %v898, 2147483648
        %v921 = vmul.f32 %v920, 1.442695
        %v922 = vpow.pop %v921
        %v923 = vadd.f32 %v922, 1.0
        %v924 = vrcp.pop %v923
        %v925 = vmul.f32 %v923, %v924
        %v926 = vsub.f32 1.0, %v925
        %v927 = vmul.f32 %v924, %v926
        %v928 = vadd.f32 %v924, %v927
        %vm929 = vweird.f32 %v923
        %vm930 = vweird.f32 %v924
        %vm931 = vmor %vm929, %vm930
        %v932 = vsel %vm931, %v924, %v928
        %v933 = vand.u32 2147483647, %v923
        %vm934 = vcmp.eq.f32.partialorder %v933, 8.507059e+37
        %v935 = vand.u32 %v923, 2147483648
        %v936 = vor.u32 1.1754944e-38, %v935
        %v937 = vsel %vm934, %v936, %v932
        %v938 = vmul.f32 1.0, %v937
        %v939 = vmul.f32 %v918, %v759
        %v940 = vmul.f32 %v918, %v919
        %942 = vrot.lane.b32.xlu0 %v940, 64
        %v943 = vpop.permute.xlu0 %942
        %v945 = vadd.f32 %v939, %v943
        %v946 = vtanh.pop %v945
        %v947 = vmul.f32 %v938, %v946
        %949 = vrot.lane.b32.xlu0 %v947, 64
        %v950 = vpop.permute.xlu0 %949
        %v952 = vsel %vm478, %v950, %v854
        %953 = vmatpush.msra.mxu0 %v474
        %954 = vmatpush.msra.mxu0 %v472
        %955 = vmatpush.msra.mxu0 %v470
        %956 = vmatpush.msra.mxu0 %v468
        %957 = vmatpush.msra.mxu0 %v466
        %958 = vmatpush.msra.mxu0 %v464
        %959 = vmatpush.msra.mxu0 %v462
        %960 = vmatpush.msra.mxu0 %v460
        %961 = vmatpush.msra.mxu0 %v458
        %962 = vmatpush.msra.mxu0 %v456
        %963 = vmatpush.msra.mxu0 %v454
        %964 = vmatpush.msra.mxu0 %v452
        %965 = vmatpush.msra.mxu0 %v450
        %966 = vmatpush.msra.mxu0 %v448
        %967 = vmatpush.msra.mxu0 %v446
        %968 = vmatpush.msra.mxu0 %v444
        %969 = vmatmul.f32.gmra.mxu0 %v952
        %v970 = vpop.f32.mrf.mxu0
        %v971 = vadd.f32 %v577, %v970
        %972 = vdwg.mxu0
        %973 = vmatpush.msra.mxu0 %v475
        %974 = vmatpush.msra.mxu0 %v473
        %975 = vmatpush.msra.mxu0 %v471
        %976 = vmatpush.msra.mxu0 %v469
        %977 = vmatpush.msra.mxu0 %v467
        %978 = vmatpush.msra.mxu0 %v465
        %979 = vmatpush.msra.mxu0 %v463
        %980 = vmatpush.msra.mxu0 %v461
        %981 = vmatpush.msra.mxu0 %v459
        %982 = vmatpush.msra.mxu0 %v457
        %983 = vmatpush.msra.mxu0 %v455
        %984 = vmatpush.msra.mxu0 %v453
        %985 = vmatpush.msra.mxu0 %v451
        %986 = vmatpush.msra.mxu0 %v449
        %987 = vmatpush.msra.mxu0 %v447
        %988 = vmatpush.msra.mxu0 %v445
        %989 = vmatmul.f32.gmra.mxu0 %v952
        %v990 = vpop.f32.mrf.mxu0
        %v991 = vadd.f32 %v578, %v990
        %992 = vdwg.mxu0
        %v993 = vxor.u32 %v971, 2147483648
        %v994 = vmul.f32 %v993, 1.442695
        %v995 = vpow.pop %v994
        %v996 = vadd.f32 %v995, 1.0
        %v997 = vrcp.pop %v996
        %v998 = vmul.f32 %v996, %v997
        %v999 = vsub.f32 1.0, %v998
        %v1000 = vmul.f32 %v997, %v999
        %v1001 = vadd.f32 %v997, %v1000
        %vm1002 = vweird.f32 %v996
        %vm1003 = vweird.f32 %v997
        %vm1004 = vmor %vm1002, %vm1003
        %v1005 = vsel %vm1004, %v997, %v1001
        %v1006 = vand.u32 2147483647, %v996
        %vm1007 = vcmp.eq.f32.partialorder %v1006, 8.507059e+37
        %v1008 = vand.u32 %v996, 2147483648
        %v1009 = vor.u32 1.1754944e-38, %v1008
        %v1010 = vsel %vm1007, %v1009, %v1005
        %v1011 = vmul.f32 1.0, %v1010
        %v1012 = vtanh.pop %v991
        %v1013 = vxor.u32 %v991, 2147483648
        %v1014 = vmul.f32 %v1013, 1.442695
        %v1015 = vpow.pop %v1014
        %v1016 = vadd.f32 %v1015, 1.0
        %v1017 = vrcp.pop %v1016
        %v1018 = vmul.f32 %v1016, %v1017
        %v1019 = vsub.f32 1.0, %v1018
        %v1020 = vmul.f32 %v1017, %v1019
        %v1021 = vadd.f32 %v1017, %v1020
        %vm1022 = vweird.f32 %v1016
        %vm1023 = vweird.f32 %v1017
        %vm1024 = vmor %vm1022, %vm1023
        %v1025 = vsel %vm1024, %v1017, %v1021
        %v1026 = vand.u32 2147483647, %v1016
        %vm1027 = vcmp.eq.f32.partialorder %v1026, 8.507059e+37
        %v1028 = vand.u32 %v1016, 2147483648
        %v1029 = vor.u32 1.1754944e-38, %v1028
        %v1030 = vsel %vm1027, %v1029, %v1025
        %v1031 = vmul.f32 1.0, %v1030
        %v1032 = vmul.f32 %v1011, %v852
        %v1033 = vmul.f32 %v1011, %v1012
        %1035 = vrot.lane.b32.xlu0 %v1033, 64
        %v1036 = vpop.permute.xlu0 %1035
        %v1038 = vadd.f32 %v1032, %v1036
        %v1039 = vtanh.pop %v1038
        %v1040 = vmul.f32 %v1031, %v1039
        %s1041 = scalar_lea.vmem %s375, 48 [#allocation2]
        %v1042 = vld [vmem:[%s1041] sm:$0xff]
        %v1043 = vld [vmem:[%s1041 + $0x8] sm:$0xff]
        %v1044 = vsel %vm478, %v950, 0
        %1046 = vmatpush.msra.mxu0 0.0
        %1047 = vmatpush.msra.mxu0 0.0
        %1048 = vmatpush.msra.mxu0 0.0
        %1049 = vmatpush.msra.mxu0 0.0
        %1050 = vmatpush.msra.mxu0 0.0
        %1051 = vmatpush.msra.mxu0 0.0
        %1052 = vmatpush.msra.mxu0 0.0
        %1053 = vmatpush.msra.mxu0 0.0
        %1054 = vmatpush.msra.mxu0 %v442
        %1055 = vmatpush.msra.mxu0 %v440
        %1056 = vmatpush.msra.mxu0 %v438
        %1057 = vmatpush.msra.mxu0 %v436
        %1058 = vmatpush.msra.mxu0 %v434
        %1059 = vmatpush.msra.mxu0 %v432
        %1060 = vmatpush.msra.mxu0 %v430
        %1061 = vmatpush.msra.mxu0 %v428
        %1062 = vmatmul.f32.gmra.mxu0 %v1044
        %v1063 = vpop.f32.mrf.mxu0
        %v1064 = vadd.f32 %v1042, %v1063
        %1065 = vdwg.mxu0
        %1066 = vmatpush.msra.mxu0 0.0
        %1067 = vmatpush.msra.mxu0 0.0
        %1068 = vmatpush.msra.mxu0 0.0
        %1069 = vmatpush.msra.mxu0 0.0
        %1070 = vmatpush.msra.mxu0 0.0
        %1071 = vmatpush.msra.mxu0 0.0
        %1072 = vmatpush.msra.mxu0 0.0
        %1073 = vmatpush.msra.mxu0 0.0
        %1074 = vmatpush.msra.mxu0 %v443
        %1075 = vmatpush.msra.mxu0 %v441
        %1076 = vmatpush.msra.mxu0 %v439
        %1077 = vmatpush.msra.mxu0 %v437
        %1078 = vmatpush.msra.mxu0 %v435
        %1079 = vmatpush.msra.mxu0 %v433
        %1080 = vmatpush.msra.mxu0 %v431
        %1081 = vmatpush.msra.mxu0 %v429
        %1082 = vmatmul.f32.gmra.mxu0 %v1044
        %v1083 = vpop.f32.mrf.mxu0
        %v1084 = vadd.f32 %v1043, %v1083
        %1085 = vdwg.mxu0
        %v1086 = vxor.u32 %v1064, 2147483648
        %v1087 = vmul.f32 %v1086, 1.442695
        %v1088 = vpow.pop %v1087
        %v1089 = vadd.f32 %v1088, 1.0
        %v1090 = vrcp.pop %v1089
        %v1091 = vmul.f32 %v1089, %v1090
        %v1092 = vsub.f32 1.0, %v1091
        %v1093 = vmul.f32 %v1090, %v1092
        %v1094 = vadd.f32 %v1090, %v1093
        %vm1095 = vweird.f32 %v1089
        %vm1096 = vweird.f32 %v1090
        %vm1097 = vmor %vm1095, %vm1096
        %v1098 = vsel %vm1097, %v1090, %v1094
        %v1099 = vand.u32 2147483647, %v1089
        %vm1100 = vcmp.eq.f32.partialorder %v1099, 8.507059e+37
        %v1101 = vand.u32 %v1089, 2147483648
        %v1102 = vor.u32 1.1754944e-38, %v1101
        %v1103 = vsel %vm1100, %v1102, %v1098
        %v1104 = vmul.f32 1.0, %v1103
        %v1105 = vtanh.pop %v1084
        %v1106 = vxor.u32 %v1084, 2147483648
        %v1107 = vmul.f32 %v1106, 1.442695
        %v1108 = vpow.pop %v1107
        %v1109 = vadd.f32 %v1108, 1.0
        %v1110 = vrcp.pop %v1109
        %v1111 = vmul.f32 %v1109, %v1110
        %v1112 = vsub.f32 1.0, %v1111
        %v1113 = vmul.f32 %v1110, %v1112
        %v1114 = vadd.f32 %v1110, %v1113
        %vm1115 = vweird.f32 %v1109
        %vm1116 = vweird.f32 %v1110
        %vm1117 = vmor %vm1115, %vm1116
        %v1118 = vsel %vm1117, %v1110, %v1114
        %v1119 = vand.u32 2147483647, %v1109
        %vm1120 = vcmp.eq.f32.partialorder %v1119, 8.507059e+37
        %v1121 = vand.u32 %v1109, 2147483648
        %v1122 = vor.u32 1.1754944e-38, %v1121
        %v1123 = vsel %vm1120, %v1122, %v1118
        %v1124 = vmul.f32 1.0, %v1123
        %v1125 = vmul.f32 %v1104, %v945
        %v1126 = vmul.f32 %v1104, %v1105
        %1128 = vrot.lane.b32.xlu0 %v1126, 64
        %v1129 = vpop.permute.xlu0 %1128
        %v1131 = vadd.f32 %v1125, %v1129
        %v1132 = vtanh.pop %v1131
        %v1133 = vmul.f32 %v1124, %v1132
        %1135 = vrot.lane.b32.xlu0 %v1133, 64
        %v1136 = vpop.permute.xlu0 %1135
        %v1138 = vsel %vm478, %v1136, %v1040
        %1139 = vmatpush.msra.mxu0 %v474
        %1140 = vmatpush.msra.mxu0 %v472
        %1141 = vmatpush.msra.mxu0 %v470
        %1142 = vmatpush.msra.mxu0 %v468
        %1143 = vmatpush.msra.mxu0 %v466
        %1144 = vmatpush.msra.mxu0 %v464
        %1145 = vmatpush.msra.mxu0 %v462
        %1146 = vmatpush.msra.mxu0 %v460
        %1147 = vmatpush.msra.mxu0 %v458
        %1148 = vmatpush.msra.mxu0 %v456
        %1149 = vmatpush.msra.mxu0 %v454
        %1150 = vmatpush.msra.mxu0 %v452
        %1151 = vmatpush.msra.mxu0 %v450
        %1152 = vmatpush.msra.mxu0 %v448
        %1153 = vmatpush.msra.mxu0 %v446
        %1154 = vmatpush.msra.mxu0 %v444
        %1155 = vmatmul.f32.gmra.mxu0 %v1138
        %v1156 = vpop.f32.mrf.mxu0
        %v1157 = vadd.f32 %v577, %v1156
        %1158 = vdwg.mxu0
        %1159 = vmatpush.msra.mxu0 %v475
        %1160 = vmatpush.msra.mxu0 %v473
        %1161 = vmatpush.msra.mxu0 %v471
        %1162 = vmatpush.msra.mxu0 %v469
        %1163 = vmatpush.msra.mxu0 %v467
        %1164 = vmatpush.msra.mxu0 %v465
        %1165 = vmatpush.msra.mxu0 %v463
        %1166 = vmatpush.msra.mxu0 %v461
        %1167 = vmatpush.msra.mxu0 %v459
        %1168 = vmatpush.msra.mxu0 %v457
        %1169 = vmatpush.msra.mxu0 %v455
        %1170 = vmatpush.msra.mxu0 %v453
        %1171 = vmatpush.msra.mxu0 %v451
        %1172 = vmatpush.msra.mxu0 %v449
        %1173 = vmatpush.msra.mxu0 %v447
        %1174 = vmatpush.msra.mxu0 %v445
        %1175 = vmatmul.f32.gmra.mxu0 %v1138
        %v1176 = vpop.f32.mrf.mxu0
        %v1177 = vadd.f32 %v578, %v1176
        %1178 = vdwg.mxu0
        %v1179 = vxor.u32 %v1157, 2147483648
        %v1180 = vmul.f32 %v1179, 1.442695
        %v1181 = vpow.pop %v1180
        %v1182 = vadd.f32 %v1181, 1.0
        %v1183 = vrcp.pop %v1182
        %v1184 = vmul.f32 %v1182, %v1183
        %v1185 = vsub.f32 1.0, %v1184
        %v1186 = vmul.f32 %v1183, %v1185
        %v1187 = vadd.f32 %v1183, %v1186
        %vm1188 = vweird.f32 %v1182
        %vm1189 = vweird.f32 %v1183
        %vm1190 = vmor %vm1188, %vm1189
        %v1191 = vsel %vm1190, %v1183, %v1187
        %v1192 = vand.u32 2147483647, %v1182
        %vm1193 = vcmp.eq.f32.partialorder %v1192, 8.507059e+37
        %v1194 = vand.u32 %v1182, 2147483648
        %v1195 = vor.u32 1.1754944e-38, %v1194
        %v1196 = vsel %vm1193, %v1195, %v1191
        %v1197 = vmul.f32 1.0, %v1196
        %v1198 = vtanh.pop %v1177
        %v1199 = vxor.u32 %v1177, 2147483648
        %v1200 = vmul.f32 %v1199, 1.442695
        %v1201 = vpow.pop %v1200
        %v1202 = vadd.f32 %v1201, 1.0
        %v1203 = vrcp.pop %v1202
        %v1204 = vmul.f32 %v1202, %v1203
        %v1205 = vsub.f32 1.0, %v1204
        %v1206 = vmul.f32 %v1203, %v1205
        %v1207 = vadd.f32 %v1203, %v1206
        %vm1208 = vweird.f32 %v1202
        %vm1209 = vweird.f32 %v1203
        %vm1210 = vmor %vm1208, %vm1209
        %v1211 = vsel %vm1210, %v1203, %v1207
        %v1212 = vand.u32 2147483647, %v1202
        %vm1213 = vcmp.eq.f32.partialorder %v1212, 8.507059e+37
        %v1214 = vand.u32 %v1202, 2147483648
        %v1215 = vor.u32 1.1754944e-38, %v1214
        %v1216 = vsel %vm1213, %v1215, %v1211
        %v1217 = vmul.f32 1.0, %v1216
        %v1218 = vmul.f32 %v1197, %v1038
        %v1219 = vmul.f32 %v1197, %v1198
        %1221 = vrot.lane.b32.xlu0 %v1219, 64
        %v1222 = vpop.permute.xlu0 %1221
        %v1224 = vadd.f32 %v1218, %v1222
        %v1225 = vtanh.pop %v1224
        %v1226 = vmul.f32 %v1217, %v1225
        %s1227 = scalar_lea.vmem %s375, 64 [#allocation2]
        %v1228 = vld [vmem:[%s1227] sm:$0xff]
        %v1229 = vld [vmem:[%s1227 + $0x8] sm:$0xff]
        %v1230 = vsel %vm478, %v1136, 0
        %1232 = vmatpush.msra.mxu0 0.0
        %1233 = vmatpush.msra.mxu0 0.0
        %1234 = vmatpush.msra.mxu0 0.0
        %1235 = vmatpush.msra.mxu0 0.0
        %1236 = vmatpush.msra.mxu0 0.0
        %1237 = vmatpush.msra.mxu0 0.0
        %1238 = vmatpush.msra.mxu0 0.0
        %1239 = vmatpush.msra.mxu0 0.0
        %1240 = vmatpush.msra.mxu0 %v442
        %1241 = vmatpush.msra.mxu0 %v440
        %1242 = vmatpush.msra.mxu0 %v438
        %1243 = vmatpush.msra.mxu0 %v436
        %1244 = vmatpush.msra.mxu0 %v434
        %1245 = vmatpush.msra.mxu0 %v432
        %1246 = vmatpush.msra.mxu0 %v430
        %1247 = vmatpush.msra.mxu0 %v428
        %1248 = vmatmul.f32.gmra.mxu0 %v1230
        %v1249 = vpop.f32.mrf.mxu0
        %v1250 = vadd.f32 %v1228, %v1249
        %1251 = vdwg.mxu0
        %1252 = vmatpush.msra.mxu0 0.0
        %1253 = vmatpush.msra.mxu0 0.0
        %1254 = vmatpush.msra.mxu0 0.0
        %1255 = vmatpush.msra.mxu0 0.0
        %1256 = vmatpush.msra.mxu0 0.0
        %1257 = vmatpush.msra.mxu0 0.0
        %1258 = vmatpush.msra.mxu0 0.0
        %1259 = vmatpush.msra.mxu0 0.0
        %1260 = vmatpush.msra.mxu0 %v443
        %1261 = vmatpush.msra.mxu0 %v441
        %1262 = vmatpush.msra.mxu0 %v439
        %1263 = vmatpush.msra.mxu0 %v437
        %1264 = vmatpush.msra.mxu0 %v435
        %1265 = vmatpush.msra.mxu0 %v433
        %1266 = vmatpush.msra.mxu0 %v431
        %1267 = vmatpush.msra.mxu0 %v429
        %1268 = vmatmul.f32.gmra.mxu0 %v1230
        %v1269 = vpop.f32.mrf.mxu0
        %v1270 = vadd.f32 %v1229, %v1269
        %1271 = vdwg.mxu0
        %v1272 = vxor.u32 %v1250, 2147483648
        %v1273 = vmul.f32 %v1272, 1.442695
        %v1274 = vpow.pop %v1273
        %v1275 = vadd.f32 %v1274, 1.0
        %v1276 = vrcp.pop %v1275
        %v1277 = vmul.f32 %v1275, %v1276
        %v1278 = vsub.f32 1.0, %v1277
        %v1279 = vmul.f32 %v1276, %v1278
        %v1280 = vadd.f32 %v1276, %v1279
        %vm1281 = vweird.f32 %v1275
        %vm1282 = vweird.f32 %v1276
        %vm1283 = vmor %vm1281, %vm1282
        %v1284 = vsel %vm1283, %v1276, %v1280
        %v1285 = vand.u32 2147483647, %v1275
        %vm1286 = vcmp.eq.f32.partialorder %v1285, 8.507059e+37
        %v1287 = vand.u32 %v1275, 2147483648
        %v1288 = vor.u32 1.1754944e-38, %v1287
        %v1289 = vsel %vm1286, %v1288, %v1284
        %v1290 = vmul.f32 1.0, %v1289
        %v1291 = vtanh.pop %v1270
        %v1292 = vxor.u32 %v1270, 2147483648
        %v1293 = vmul.f32 %v1292, 1.442695
        %v1294 = vpow.pop %v1293
        %v1295 = vadd.f32 %v1294, 1.0
        %v1296 = vrcp.pop %v1295
        %v1297 = vmul.f32 %v1295, %v1296
        %v1298 = vsub.f32 1.0, %v1297
        %v1299 = vmul.f32 %v1296, %v1298
        %v1300 = vadd.f32 %v1296, %v1299
        %vm1301 = vweird.f32 %v1295
        %vm1302 = vweird.f32 %v1296
        %vm1303 = vmor %vm1301, %vm1302
        %v1304 = vsel %vm1303, %v1296, %v1300
        %v1305 = vand.u32 2147483647, %v1295
        %vm1306 = vcmp.eq.f32.partialorder %v1305, 8.507059e+37
        %v1307 = vand.u32 %v1295, 2147483648
        %v1308 = vor.u32 1.1754944e-38, %v1307
        %v1309 = vsel %vm1306, %v1308, %v1304
        %v1310 = vmul.f32 1.0, %v1309
        %v1311 = vmul.f32 %v1290, %v1131
        %v1312 = vmul.f32 %v1290, %v1291
        %1314 = vrot.lane.b32.xlu0 %v1312, 64
        %v1315 = vpop.permute.xlu0 %1314
        %v1317 = vadd.f32 %v1311, %v1315
        %v1318 = vtanh.pop %v1317
        %v1319 = vmul.f32 %v1310, %v1318
        %1321 = vrot.lane.b32.xlu0 %v1319, 64
        %v1322 = vpop.permute.xlu0 %1321
        %v1324 = vsel %vm478, %v1322, %v1226
        %1325 = vmatpush.msra.mxu0 %v474
        %1326 = vmatpush.msra.mxu0 %v472
        %1327 = vmatpush.msra.mxu0 %v470
        %1328 = vmatpush.msra.mxu0 %v468
        %1329 = vmatpush.msra.mxu0 %v466
        %1330 = vmatpush.msra.mxu0 %v464
        %1331 = vmatpush.msra.mxu0 %v462
        %1332 = vmatpush.msra.mxu0 %v460
        %1333 = vmatpush.msra.mxu0 %v458
        %1334 = vmatpush.msra.mxu0 %v456
        %1335 = vmatpush.msra.mxu0 %v454
        %1336 = vmatpush.msra.mxu0 %v452
        %1337 = vmatpush.msra.mxu0 %v450
        %1338 = vmatpush.msra.mxu0 %v448
        %1339 = vmatpush.msra.mxu0 %v446
        %1340 = vmatpush.msra.mxu0 %v444
        %1341 = vmatmul.f32.gmra.mxu0 %v1324
        %v1342 = vpop.f32.mrf.mxu0
        %v1343 = vadd.f32 %v577, %v1342
        %1344 = vdwg.mxu0
        %1345 = vmatpush.msra.mxu0 %v475
        %1346 = vmatpush.msra.mxu0 %v473
        %1347 = vmatpush.msra.mxu0 %v471
        %1348 = vmatpush.msra.mxu0 %v469
        %1349 = vmatpush.msra.mxu0 %v467
        %1350 = vmatpush.msra.mxu0 %v465
        %1351 = vmatpush.msra.mxu0 %v463
        %1352 = vmatpush.msra.mxu0 %v461
        %1353 = vmatpush.msra.mxu0 %v459
        %1354 = vmatpush.msra.mxu0 %v457
        %1355 = vmatpush.msra.mxu0 %v455
        %1356 = vmatpush.msra.mxu0 %v453
        %1357 = vmatpush.msra.mxu0 %v451
        %1358 = vmatpush.msra.mxu0 %v449
        %1359 = vmatpush.msra.mxu0 %v447
        %1360 = vmatpush.msra.mxu0 %v445
        %1361 = vmatmul.f32.gmra.mxu0 %v1324
        %v1362 = vpop.f32.mrf.mxu0
        %v1363 = vadd.f32 %v578, %v1362
        %1364 = vdwg.mxu0
        %v1365 = vxor.u32 %v1343, 2147483648
        %v1366 = vmul.f32 %v1365, 1.442695
        %v1367 = vpow.pop %v1366
        %v1368 = vadd.f32 %v1367, 1.0
        %v1369 = vrcp.pop %v1368
        %v1370 = vmul.f32 %v1368, %v1369
        %v1371 = vsub.f32 1.0, %v1370
        %v1372 = vmul.f32 %v1369, %v1371
        %v1373 = vadd.f32 %v1369, %v1372
        %vm1374 = vweird.f32 %v1368
        %vm1375 = vweird.f32 %v1369
        %vm1376 = vmor %vm1374, %vm1375
        %v1377 = vsel %vm1376, %v1369, %v1373
        %v1378 = vand.u32 2147483647, %v1368
        %vm1379 = vcmp.eq.f32.partialorder %v1378, 8.507059e+37
        %v1380 = vand.u32 %v1368, 2147483648
        %v1381 = vor.u32 1.1754944e-38, %v1380
        %v1382 = vsel %vm1379, %v1381, %v1377
        %v1383 = vmul.f32 1.0, %v1382
        %v1384 = vtanh.pop %v1363
        %v1385 = vxor.u32 %v1363, 2147483648
        %v1386 = vmul.f32 %v1385, 1.442695
        %v1387 = vpow.pop %v1386
        %v1388 = vadd.f32 %v1387, 1.0
        %v1389 = vrcp.pop %v1388
        %v1390 = vmul.f32 %v1388, %v1389
        %v1391 = vsub.f32 1.0, %v1390
        %v1392 = vmul.f32 %v1389, %v1391
        %v1393 = vadd.f32 %v1389, %v1392
        %vm1394 = vweird.f32 %v1388
        %vm1395 = vweird.f32 %v1389
        %vm1396 = vmor %vm1394, %vm1395
        %v1397 = vsel %vm1396, %v1389, %v1393
        %v1398 = vand.u32 2147483647, %v1388
        %vm1399 = vcmp.eq.f32.partialorder %v1398, 8.507059e+37
        %v1400 = vand.u32 %v1388, 2147483648
        %v1401 = vor.u32 1.1754944e-38, %v1400
        %v1402 = vsel %vm1399, %v1401, %v1397
        %v1403 = vmul.f32 1.0, %v1402
        %v1404 = vmul.f32 %v1383, %v1224
        %v1405 = vmul.f32 %v1383, %v1384
        %1407 = vrot.lane.b32.xlu0 %v1405, 64
        %v1408 = vpop.permute.xlu0 %1407
        %v1410 = vadd.f32 %v1404, %v1408
        %v1411 = vtanh.pop %v1410
        %v1412 = vmul.f32 %v1403, %v1411
        %s1413 = scalar_lea.vmem %s375, 80 [#allocation2]
        %v1414 = vld [vmem:[%s1413] sm:$0xff]
        %v1415 = vld [vmem:[%s1413 + $0x8] sm:$0xff]
        %v1416 = vsel %vm478, %v1322, 0
        %1418 = vmatpush.msra.mxu0 0.0
        %1419 = vmatpush.msra.mxu0 0.0
        %1420 = vmatpush.msra.mxu0 0.0
        %1421 = vmatpush.msra.mxu0 0.0
        %1422 = vmatpush.msra.mxu0 0.0
        %1423 = vmatpush.msra.mxu0 0.0
        %1424 = vmatpush.msra.mxu0 0.0
        %1425 = vmatpush.msra.mxu0 0.0
        %1426 = vmatpush.msra.mxu0 %v442
        %1427 = vmatpush.msra.mxu0 %v440
        %1428 = vmatpush.msra.mxu0 %v438
        %1429 = vmatpush.msra.mxu0 %v436
        %1430 = vmatpush.msra.mxu0 %v434
        %1431 = vmatpush.msra.mxu0 %v432
        %1432 = vmatpush.msra.mxu0 %v430
        %1433 = vmatpush.msra.mxu0 %v428
        %1434 = vmatmul.f32.gmra.mxu0 %v1416
        %v1435 = vpop.f32.mrf.mxu0
        %v1436 = vadd.f32 %v1414, %v1435
        %1437 = vdwg.mxu0
        %1438 = vmatpush.msra.mxu0 0.0
        %1439 = vmatpush.msra.mxu0 0.0
        %1440 = vmatpush.msra.mxu0 0.0
        %1441 = vmatpush.msra.mxu0 0.0
        %1442 = vmatpush.msra.mxu0 0.0
        %1443 = vmatpush.msra.mxu0 0.0
        %1444 = vmatpush.msra.mxu0 0.0
        %1445 = vmatpush.msra.mxu0 0.0
        %1446 = vmatpush.msra.mxu0 %v443
        %1447 = vmatpush.msra.mxu0 %v441
        %1448 = vmatpush.msra.mxu0 %v439
        %1449 = vmatpush.msra.mxu0 %v437
        %1450 = vmatpush.msra.mxu0 %v435
        %1451 = vmatpush.msra.mxu0 %v433
        %1452 = vmatpush.msra.mxu0 %v431
        %1453 = vmatpush.msra.mxu0 %v429
        %1454 = vmatmul.f32.gmra.mxu0 %v1416
        %v1455 = vpop.f32.mrf.mxu0
        %v1456 = vadd.f32 %v1415, %v1455
        %1457 = vdwg.mxu0
        %v1458 = vxor.u32 %v1436, 2147483648
        %v1459 = vmul.f32 %v1458, 1.442695
        %v1460 = vpow.pop %v1459
        %v1461 = vadd.f32 %v1460, 1.0
        %v1462 = vrcp.pop %v1461
        %v1463 = vmul.f32 %v1461, %v1462
        %v1464 = vsub.f32 1.0, %v1463
        %v1465 = vmul.f32 %v1462, %v1464
        %v1466 = vadd.f32 %v1462, %v1465
        %vm1467 = vweird.f32 %v1461
        %vm1468 = vweird.f32 %v1462
        %vm1469 = vmor %vm1467, %vm1468
        %v1470 = vsel %vm1469, %v1462, %v1466
        %v1471 = vand.u32 2147483647, %v1461
        %vm1472 = vcmp.eq.f32.partialorder %v1471, 8.507059e+37
        %v1473 = vand.u32 %v1461, 2147483648
        %v1474 = vor.u32 1.1754944e-38, %v1473
        %v1475 = vsel %vm1472, %v1474, %v1470
        %v1476 = vmul.f32 1.0, %v1475
        %v1477 = vtanh.pop %v1456
        %v1478 = vxor.u32 %v1456, 2147483648
        %v1479 = vmul.f32 %v1478, 1.442695
        %v1480 = vpow.pop %v1479
        %v1481 = vadd.f32 %v1480, 1.0
        %v1482 = vrcp.pop %v1481
        %v1483 = vmul.f32 %v1481, %v1482
        %v1484 = vsub.f32 1.0, %v1483
        %v1485 = vmul.f32 %v1482, %v1484
        %v1486 = vadd.f32 %v1482, %v1485
        %vm1487 = vweird.f32 %v1481
        %vm1488 = vweird.f32 %v1482
        %vm1489 = vmor %vm1487, %vm1488
        %v1490 = vsel %vm1489, %v1482, %v1486
        %v1491 = vand.u32 2147483647, %v1481
        %vm1492 = vcmp.eq.f32.partialorder %v1491, 8.507059e+37
        %v1493 = vand.u32 %v1481, 2147483648
        %v1494 = vor.u32 1.1754944e-38, %v1493
        %v1495 = vsel %vm1492, %v1494, %v1490
        %v1496 = vmul.f32 1.0, %v1495
        %v1497 = vmul.f32 %v1476, %v1317
        %v1498 = vmul.f32 %v1476, %v1477
        %1500 = vrot.lane.b32.xlu0 %v1498, 64
        %v1501 = vpop.permute.xlu0 %1500
        %v1503 = vadd.f32 %v1497, %v1501
        %v1504 = vtanh.pop %v1503
        %v1505 = vmul.f32 %v1496, %v1504
        %1507 = vrot.lane.b32.xlu0 %v1505, 64
        %v1508 = vpop.permute.xlu0 %1507
        %v1510 = vsel %vm478, %v1508, %v1412
        %1511 = vmatpush.msra.mxu0 %v474
        %1512 = vmatpush.msra.mxu0 %v472
        %1513 = vmatpush.msra.mxu0 %v470
        %1514 = vmatpush.msra.mxu0 %v468
        %1515 = vmatpush.msra.mxu0 %v466
        %1516 = vmatpush.msra.mxu0 %v464
        %1517 = vmatpush.msra.mxu0 %v462
        %1518 = vmatpush.msra.mxu0 %v460
        %1519 = vmatpush.msra.mxu0 %v458
        %1520 = vmatpush.msra.mxu0 %v456
        %1521 = vmatpush.msra.mxu0 %v454
        %1522 = vmatpush.msra.mxu0 %v452
        %1523 = vmatpush.msra.mxu0 %v450
        %1524 = vmatpush.msra.mxu0 %v448
        %1525 = vmatpush.msra.mxu0 %v446
        %1526 = vmatpush.msra.mxu0 %v444
        %1527 = vmatmul.f32.gmra.mxu0 %v1510
        %v1528 = vpop.f32.mrf.mxu0
        %v1529 = vadd.f32 %v577, %v1528
        %1530 = vdwg.mxu0
        %1531 = vmatpush.msra.mxu0 %v475
        %1532 = vmatpush.msra.mxu0 %v473
        %1533 = vmatpush.msra.mxu0 %v471
        %1534 = vmatpush.msra.mxu0 %v469
        %1535 = vmatpush.msra.mxu0 %v467
        %1536 = vmatpush.msra.mxu0 %v465
        %1537 = vmatpush.msra.mxu0 %v463
        %1538 = vmatpush.msra.mxu0 %v461
        %1539 = vmatpush.msra.mxu0 %v459
        %1540 = vmatpush.msra.mxu0 %v457
        %1541 = vmatpush.msra.mxu0 %v455
        %1542 = vmatpush.msra.mxu0 %v453
        %1543 = vmatpush.msra.mxu0 %v451
        %1544 = vmatpush.msra.mxu0 %v449
        %1545 = vmatpush.msra.mxu0 %v447
        %1546 = vmatpush.msra.mxu0 %v445
        %1547 = vmatmul.f32.gmra.mxu0 %v1510
        %v1548 = vpop.f32.mrf.mxu0
        %v1549 = vadd.f32 %v578, %v1548
        %1550 = vdwg.mxu0
        %v1551 = vxor.u32 %v1529, 2147483648
        %v1552 = vmul.f32 %v1551, 1.442695
        %v1553 = vpow.pop %v1552
        %v1554 = vadd.f32 %v1553, 1.0
        %v1555 = vrcp.pop %v1554
        %v1556 = vmul.f32 %v1554, %v1555
        %v1557 = vsub.f32 1.0, %v1556
        %v1558 = vmul.f32 %v1555, %v1557
        %v1559 = vadd.f32 %v1555, %v1558
        %vm1560 = vweird.f32 %v1554
        %vm1561 = vweird.f32 %v1555
        %vm1562 = vmor %vm1560, %vm1561
        %v1563 = vsel %vm1562, %v1555, %v1559
        %v1564 = vand.u32 2147483647, %v1554
        %vm1565 = vcmp.eq.f32.partialorder %v1564, 8.507059e+37
        %v1566 = vand.u32 %v1554, 2147483648
        %v1567 = vor.u32 1.1754944e-38, %v1566
        %v1568 = vsel %vm1565, %v1567, %v1563
        %v1569 = vmul.f32 1.0, %v1568
        %v1570 = vtanh.pop %v1549
        %v1571 = vxor.u32 %v1549, 2147483648
        %v1572 = vmul.f32 %v1571, 1.442695
        %v1573 = vpow.pop %v1572
        %v1574 = vadd.f32 %v1573, 1.0
        %v1575 = vrcp.pop %v1574
        %v1576 = vmul.f32 %v1574, %v1575
        %v1577 = vsub.f32 1.0, %v1576
        %v1578 = vmul.f32 %v1575, %v1577
        %v1579 = vadd.f32 %v1575, %v1578
        %vm1580 = vweird.f32 %v1574
        %vm1581 = vweird.f32 %v1575
        %vm1582 = vmor %vm1580, %vm1581
        %v1583 = vsel %vm1582, %v1575, %v1579
        %v1584 = vand.u32 2147483647, %v1574
        %vm1585 = vcmp.eq.f32.partialorder %v1584, 8.507059e+37
        %v1586 = vand.u32 %v1574, 2147483648
        %v1587 = vor.u32 1.1754944e-38, %v1586
        %v1588 = vsel %vm1585, %v1587, %v1583
        %v1589 = vmul.f32 1.0, %v1588
        %v1590 = vmul.f32 %v1569, %v1410
        %v1591 = vmul.f32 %v1569, %v1570
        %1593 = vrot.lane.b32.xlu0 %v1591, 64
        %v1594 = vpop.permute.xlu0 %1593
        %v1596 = vadd.f32 %v1590, %v1594
        %v1597 = vtanh.pop %v1596
        %v1598 = vmul.f32 %v1589, %v1597
        %s1599 = scalar_lea.vmem %s375, 96 [#allocation2]
        %v1600 = vld [vmem:[%s1599] sm:$0xff]
        %v1601 = vld [vmem:[%s1599 + $0x8] sm:$0xff]
        %v1602 = vsel %vm478, %v1508, 0
        %1604 = vmatpush.msra.mxu0 0.0
        %1605 = vmatpush.msra.mxu0 0.0
        %1606 = vmatpush.msra.mxu0 0.0
        %1607 = vmatpush.msra.mxu0 0.0
        %1608 = vmatpush.msra.mxu0 0.0
        %1609 = vmatpush.msra.mxu0 0.0
        %1610 = vmatpush.msra.mxu0 0.0
        %1611 = vmatpush.msra.mxu0 0.0
        %1612 = vmatpush.msra.mxu0 %v442
        %1613 = vmatpush.msra.mxu0 %v440
        %1614 = vmatpush.msra.mxu0 %v438
        %1615 = vmatpush.msra.mxu0 %v436
        %1616 = vmatpush.msra.mxu0 %v434
        %1617 = vmatpush.msra.mxu0 %v432
        %1618 = vmatpush.msra.mxu0 %v430
        %1619 = vmatpush.msra.mxu0 %v428
        %1620 = vmatmul.f32.gmra.mxu0 %v1602
        %v1621 = vpop.f32.mrf.mxu0
        %v1622 = vadd.f32 %v1600, %v1621
        %1623 = vdwg.mxu0
        %1624 = vmatpush.msra.mxu0 0.0
        %1625 = vmatpush.msra.mxu0 0.0
        %1626 = vmatpush.msra.mxu0 0.0
        %1627 = vmatpush.msra.mxu0 0.0
        %1628 = vmatpush.msra.mxu0 0.0
        %1629 = vmatpush.msra.mxu0 0.0
        %1630 = vmatpush.msra.mxu0 0.0
        %1631 = vmatpush.msra.mxu0 0.0
        %1632 = vmatpush.msra.mxu0 %v443
        %1633 = vmatpush.msra.mxu0 %v441
        %1634 = vmatpush.msra.mxu0 %v439
        %1635 = vmatpush.msra.mxu0 %v437
        %1636 = vmatpush.msra.mxu0 %v435
        %1637 = vmatpush.msra.mxu0 %v433
        %1638 = vmatpush.msra.mxu0 %v431
        %1639 = vmatpush.msra.mxu0 %v429
        %1640 = vmatmul.f32.gmra.mxu0 %v1602
        %v1641 = vpop.f32.mrf.mxu0
        %v1642 = vadd.f32 %v1601, %v1641
        %1643 = vdwg.mxu0
        %v1644 = vxor.u32 %v1622, 2147483648
        %v1645 = vmul.f32 %v1644, 1.442695
        %v1646 = vpow.pop %v1645
        %v1647 = vadd.f32 %v1646, 1.0
        %v1648 = vrcp.pop %v1647
        %v1649 = vmul.f32 %v1647, %v1648
        %v1650 = vsub.f32 1.0, %v1649
        %v1651 = vmul.f32 %v1648, %v1650
        %v1652 = vadd.f32 %v1648, %v1651
        %vm1653 = vweird.f32 %v1647
        %vm1654 = vweird.f32 %v1648
        %vm1655 = vmor %vm1653, %vm1654
        %v1656 = vsel %vm1655, %v1648, %v1652
        %v1657 = vand.u32 2147483647, %v1647
        %vm1658 = vcmp.eq.f32.partialorder %v1657, 8.507059e+37
        %v1659 = vand.u32 %v1647, 2147483648
        %v1660 = vor.u32 1.1754944e-38, %v1659
        %v1661 = vsel %vm1658, %v1660, %v1656
        %v1662 = vmul.f32 1.0, %v1661
        %v1663 = vtanh.pop %v1642
        %v1664 = vxor.u32 %v1642, 2147483648
        %v1665 = vmul.f32 %v1664, 1.442695
        %v1666 = vpow.pop %v1665
        %v1667 = vadd.f32 %v1666, 1.0
        %v1668 = vrcp.pop %v1667
        %v1669 = vmul.f32 %v1667, %v1668
        %v1670 = vsub.f32 1.0, %v1669
        %v1671 = vmul.f32 %v1668, %v1670
        %v1672 = vadd.f32 %v1668, %v1671
        %vm1673 = vweird.f32 %v1667
        %vm1674 = vweird.f32 %v1668
        %vm1675 = vmor %vm1673, %vm1674
        %v1676 = vsel %vm1675, %v1668, %v1672
        %v1677 = vand.u32 2147483647, %v1667
        %vm1678 = vcmp.eq.f32.partialorder %v1677, 8.507059e+37
        %v1679 = vand.u32 %v1667, 2147483648
        %v1680 = vor.u32 1.1754944e-38, %v1679
        %v1681 = vsel %vm1678, %v1680, %v1676
        %v1682 = vmul.f32 1.0, %v1681
        %v1683 = vmul.f32 %v1662, %v1503
        %v1684 = vmul.f32 %v1662, %v1663
        %1686 = vrot.lane.b32.xlu0 %v1684, 64
        %v1687 = vpop.permute.xlu0 %1686
        %v1689 = vadd.f32 %v1683, %v1687
        %v1690 = vtanh.pop %v1689
        %v1691 = vmul.f32 %v1682, %v1690
        %1693 = vrot.lane.b32.xlu0 %v1691, 64
        %v1694 = vpop.permute.xlu0 %1693
        %v1696 = vsel %vm478, %v1694, %v1598
        %1697 = vmatpush.msra.mxu0 %v474
        %1698 = vmatpush.msra.mxu0 %v472
        %1699 = vmatpush.msra.mxu0 %v470
        %1700 = vmatpush.msra.mxu0 %v468
        %1701 = vmatpush.msra.mxu0 %v466
        %1702 = vmatpush.msra.mxu0 %v464
        %1703 = vmatpush.msra.mxu0 %v462
        %1704 = vmatpush.msra.mxu0 %v460
        %1705 = vmatpush.msra.mxu0 %v458
        %1706 = vmatpush.msra.mxu0 %v456
        %1707 = vmatpush.msra.mxu0 %v454
        %1708 = vmatpush.msra.mxu0 %v452
        %1709 = vmatpush.msra.mxu0 %v450
        %1710 = vmatpush.msra.mxu0 %v448
        %1711 = vmatpush.msra.mxu0 %v446
        %1712 = vmatpush.msra.mxu0 %v444
        %1713 = vmatmul.f32.gmra.mxu0 %v1696
        %v1714 = vpop.f32.mrf.mxu0
        %v1715 = vadd.f32 %v577, %v1714
        %1716 = vdwg.mxu0
        %1717 = vmatpush.msra.mxu0 %v475
        %1718 = vmatpush.msra.mxu0 %v473
        %1719 = vmatpush.msra.mxu0 %v471
        %1720 = vmatpush.msra.mxu0 %v469
        %1721 = vmatpush.msra.mxu0 %v467
        %1722 = vmatpush.msra.mxu0 %v465
        %1723 = vmatpush.msra.mxu0 %v463
        %1724 = vmatpush.msra.mxu0 %v461
        %1725 = vmatpush.msra.mxu0 %v459
        %1726 = vmatpush.msra.mxu0 %v457
        %1727 = vmatpush.msra.mxu0 %v455
        %1728 = vmatpush.msra.mxu0 %v453
        %1729 = vmatpush.msra.mxu0 %v451
        %1730 = vmatpush.msra.mxu0 %v449
        %1731 = vmatpush.msra.mxu0 %v447
        %1732 = vmatpush.msra.mxu0 %v445
        %1733 = vmatmul.f32.gmra.mxu0 %v1696
        %v1734 = vpop.f32.mrf.mxu0
        %v1735 = vadd.f32 %v578, %v1734
        %1736 = vdwg.mxu0
        %v1737 = vxor.u32 %v1715, 2147483648
        %v1738 = vmul.f32 %v1737, 1.442695
        %v1739 = vpow.pop %v1738
        %v1740 = vadd.f32 %v1739, 1.0
        %v1741 = vrcp.pop %v1740
        %v1742 = vmul.f32 %v1740, %v1741
        %v1743 = vsub.f32 1.0, %v1742
        %v1744 = vmul.f32 %v1741, %v1743
        %v1745 = vadd.f32 %v1741, %v1744
        %vm1746 = vweird.f32 %v1740
        %vm1747 = vweird.f32 %v1741
        %vm1748 = vmor %vm1746, %vm1747
        %v1749 = vsel %vm1748, %v1741, %v1745
        %v1750 = vand.u32 2147483647, %v1740
        %vm1751 = vcmp.eq.f32.partialorder %v1750, 8.507059e+37
        %v1752 = vand.u32 %v1740, 2147483648
        %v1753 = vor.u32 1.1754944e-38, %v1752
        %v1754 = vsel %vm1751, %v1753, %v1749
        %v1755 = vmul.f32 1.0, %v1754
        %v1756 = vtanh.pop %v1735
        %v1757 = vxor.u32 %v1735, 2147483648
        %v1758 = vmul.f32 %v1757, 1.442695
        %v1759 = vpow.pop %v1758
        %v1760 = vadd.f32 %v1759, 1.0
        %v1761 = vrcp.pop %v1760
        %v1762 = vmul.f32 %v1760, %v1761
        %v1763 = vsub.f32 1.0, %v1762
        %v1764 = vmul.f32 %v1761, %v1763
        %v1765 = vadd.f32 %v1761, %v1764
        %vm1766 = vweird.f32 %v1760
        %vm1767 = vweird.f32 %v1761
        %vm1768 = vmor %vm1766, %vm1767
        %v1769 = vsel %vm1768, %v1761, %v1765
        %v1770 = vand.u32 2147483647, %v1760
        %vm1771 = vcmp.eq.f32.partialorder %v1770, 8.507059e+37
        %v1772 = vand.u32 %v1760, 2147483648
        %v1773 = vor.u32 1.1754944e-38, %v1772
        %v1774 = vsel %vm1771, %v1773, %v1769
        %v1775 = vmul.f32 1.0, %v1774
        %v1776 = vmul.f32 %v1755, %v1596
        %v1777 = vmul.f32 %v1755, %v1756
        %1779 = vrot.lane.b32.xlu0 %v1777, 64
        %v1780 = vpop.permute.xlu0 %1779
        %v1782 = vadd.f32 %v1776, %v1780
        %v1783 = vtanh.pop %v1782
        %v1784 = vmul.f32 %v1775, %v1783
        %s1785 = scalar_lea.vmem %s375, 112 [#allocation2]
        %v1786 = vld [vmem:[%s1785] sm:$0xff]
        %v1787 = vld [vmem:[%s1785 + $0x8] sm:$0xff]
        %v1788 = vsel %vm478, %v1694, 0
        %1790 = vmatpush.msra.mxu0 0.0
        %1791 = vmatpush.msra.mxu0 0.0
        %1792 = vmatpush.msra.mxu0 0.0
        %1793 = vmatpush.msra.mxu0 0.0
        %1794 = vmatpush.msra.mxu0 0.0
        %1795 = vmatpush.msra.mxu0 0.0
        %1796 = vmatpush.msra.mxu0 0.0
        %1797 = vmatpush.msra.mxu0 0.0
        %1798 = vmatpush.msra.mxu0 %v442
        %1799 = vmatpush.msra.mxu0 %v440
        %1800 = vmatpush.msra.mxu0 %v438
        %1801 = vmatpush.msra.mxu0 %v436
        %1802 = vmatpush.msra.mxu0 %v434
        %1803 = vmatpush.msra.mxu0 %v432
        %1804 = vmatpush.msra.mxu0 %v430
        %1805 = vmatpush.msra.mxu0 %v428
        %1806 = vmatmul.f32.gmra.mxu0 %v1788
        %v1807 = vpop.f32.mrf.mxu0
        %v1808 = vadd.f32 %v1786, %v1807
        %1809 = vdwg.mxu0
        %1810 = vmatpush.msra.mxu0 0.0
        %1811 = vmatpush.msra.mxu0 0.0
        %1812 = vmatpush.msra.mxu0 0.0
        %1813 = vmatpush.msra.mxu0 0.0
        %1814 = vmatpush.msra.mxu0 0.0
        %1815 = vmatpush.msra.mxu0 0.0
        %1816 = vmatpush.msra.mxu0 0.0
        %1817 = vmatpush.msra.mxu0 0.0
        %1818 = vmatpush.msra.mxu0 %v443
        %1819 = vmatpush.msra.mxu0 %v441
        %1820 = vmatpush.msra.mxu0 %v439
        %1821 = vmatpush.msra.mxu0 %v437
        %1822 = vmatpush.msra.mxu0 %v435
        %1823 = vmatpush.msra.mxu0 %v433
        %1824 = vmatpush.msra.mxu0 %v431
        %1825 = vmatpush.msra.mxu0 %v429
        %1826 = vmatmul.f32.gmra.mxu0 %v1788
        %v1827 = vpop.f32.mrf.mxu0
        %v1828 = vadd.f32 %v1787, %v1827
        %1829 = vdwg.mxu0
        %v1830 = vxor.u32 %v1808, 2147483648
        %v1831 = vmul.f32 %v1830, 1.442695
        %v1832 = vpow.pop %v1831
        %v1833 = vadd.f32 %v1832, 1.0
        %v1834 = vrcp.pop %v1833
        %v1835 = vmul.f32 %v1833, %v1834
        %v1836 = vsub.f32 1.0, %v1835
        %v1837 = vmul.f32 %v1834, %v1836
        %v1838 = vadd.f32 %v1834, %v1837
        %vm1839 = vweird.f32 %v1833
        %vm1840 = vweird.f32 %v1834
        %vm1841 = vmor %vm1839, %vm1840
        %v1842 = vsel %vm1841, %v1834, %v1838
        %v1843 = vand.u32 2147483647, %v1833
        %vm1844 = vcmp.eq.f32.partialorder %v1843, 8.507059e+37
        %v1845 = vand.u32 %v1833, 2147483648
        %v1846 = vor.u32 1.1754944e-38, %v1845
        %v1847 = vsel %vm1844, %v1846, %v1842
        %v1848 = vmul.f32 1.0, %v1847
        %v1849 = vtanh.pop %v1828
        %v1850 = vxor.u32 %v1828, 2147483648
        %v1851 = vmul.f32 %v1850, 1.442695
        %v1852 = vpow.pop %v1851
        %v1853 = vadd.f32 %v1852, 1.0
        %v1854 = vrcp.pop %v1853
        %v1855 = vmul.f32 %v1853, %v1854
        %v1856 = vsub.f32 1.0, %v1855
        %v1857 = vmul.f32 %v1854, %v1856
        %v1858 = vadd.f32 %v1854, %v1857
        %vm1859 = vweird.f32 %v1853
        %vm1860 = vweird.f32 %v1854
        %vm1861 = vmor %vm1859, %vm1860
        %v1862 = vsel %vm1861, %v1854, %v1858
        %v1863 = vand.u32 2147483647, %v1853
        %vm1864 = vcmp.eq.f32.partialorder %v1863, 8.507059e+37
        %v1865 = vand.u32 %v1853, 2147483648
        %v1866 = vor.u32 1.1754944e-38, %v1865
        %v1867 = vsel %vm1864, %v1866, %v1862
        %v1868 = vmul.f32 1.0, %v1867
        %v1869 = vmul.f32 %v1848, %v1689
        %v1870 = vmul.f32 %v1848, %v1849
        %1872 = vrot.lane.b32.xlu0 %v1870, 64
        %v1873 = vpop.permute.xlu0 %1872
        %v1875 = vadd.f32 %v1869, %v1873
        %v1876 = vtanh.pop %v1875
        %v1877 = vmul.f32 %v1868, %v1876
        %1879 = vrot.lane.b32.xlu0 %v1877, 64
        %v1880 = vpop.permute.xlu0 %1879
        %v1882 = vsel %vm478, %v1880, %v1784
        %1883 = vmatpush.msra.mxu0 %v474
        %1884 = vmatpush.msra.mxu0 %v472
        %1885 = vmatpush.msra.mxu0 %v470
        %1886 = vmatpush.msra.mxu0 %v468
        %1887 = vmatpush.msra.mxu0 %v466
        %1888 = vmatpush.msra.mxu0 %v464
        %1889 = vmatpush.msra.mxu0 %v462
        %1890 = vmatpush.msra.mxu0 %v460
        %1891 = vmatpush.msra.mxu0 %v458
        %1892 = vmatpush.msra.mxu0 %v456
        %1893 = vmatpush.msra.mxu0 %v454
        %1894 = vmatpush.msra.mxu0 %v452
        %1895 = vmatpush.msra.mxu0 %v450
        %1896 = vmatpush.msra.mxu0 %v448
        %1897 = vmatpush.msra.mxu0 %v446
        %1898 = vmatpush.msra.mxu0 %v444
        %1899 = vmatmul.f32.gmra.mxu0 %v1882
        %v1900 = vpop.f32.mrf.mxu0
        %v1901 = vadd.f32 %v577, %v1900
        %1902 = vdwg.mxu0
        %1903 = vmatpush.msra.mxu0 %v475
        %1904 = vmatpush.msra.mxu0 %v473
        %1905 = vmatpush.msra.mxu0 %v471
        %1906 = vmatpush.msra.mxu0 %v469
        %1907 = vmatpush.msra.mxu0 %v467
        %1908 = vmatpush.msra.mxu0 %v465
        %1909 = vmatpush.msra.mxu0 %v463
        %1910 = vmatpush.msra.mxu0 %v461
        %1911 = vmatpush.msra.mxu0 %v459
        %1912 = vmatpush.msra.mxu0 %v457
        %1913 = vmatpush.msra.mxu0 %v455
        %1914 = vmatpush.msra.mxu0 %v453
        %1915 = vmatpush.msra.mxu0 %v451
        %1916 = vmatpush.msra.mxu0 %v449
        %1917 = vmatpush.msra.mxu0 %v447
        %1918 = vmatpush.msra.mxu0 %v445
        %1919 = vmatmul.f32.gmra.mxu0 %v1882
        %v1920 = vpop.f32.mrf.mxu0
        %v1921 = vadd.f32 %v578, %v1920
        %1922 = vdwg.mxu0
        %v1923 = vxor.u32 %v1901, 2147483648
        %v1924 = vmul.f32 %v1923, 1.442695
        %v1925 = vpow.pop %v1924
        %v1926 = vadd.f32 %v1925, 1.0
        %v1927 = vrcp.pop %v1926
        %v1928 = vmul.f32 %v1926, %v1927
        %v1929 = vsub.f32 1.0, %v1928
        %v1930 = vmul.f32 %v1927, %v1929
        %v1931 = vadd.f32 %v1927, %v1930
        %vm1932 = vweird.f32 %v1926
        %vm1933 = vweird.f32 %v1927
        %vm1934 = vmor %vm1932, %vm1933
        %v1935 = vsel %vm1934, %v1927, %v1931
        %v1936 = vand.u32 2147483647, %v1926
        %vm1937 = vcmp.eq.f32.partialorder %v1936, 8.507059e+37
        %v1938 = vand.u32 %v1926, 2147483648
        %v1939 = vor.u32 1.1754944e-38, %v1938
        %v1940 = vsel %vm1937, %v1939, %v1935
        %v1941 = vmul.f32 1.0, %v1940
        %v1942 = vtanh.pop %v1921
        %v1943 = vxor.u32 %v1921, 2147483648
        %v1944 = vmul.f32 %v1943, 1.442695
        %v1945 = vpow.pop %v1944
        %v1946 = vadd.f32 %v1945, 1.0
        %v1947 = vrcp.pop %v1946
        %v1948 = vmul.f32 %v1946, %v1947
        %v1949 = vsub.f32 1.0, %v1948
        %v1950 = vmul.f32 %v1947, %v1949
        %v1951 = vadd.f32 %v1947, %v1950
        %vm1952 = vweird.f32 %v1946
        %vm1953 = vweird.f32 %v1947
        %vm1954 = vmor %vm1952, %vm1953
        %v1955 = vsel %vm1954, %v1947, %v1951
        %v1956 = vand.u32 2147483647, %v1946
        %vm1957 = vcmp.eq.f32.partialorder %v1956, 8.507059e+37
        %v1958 = vand.u32 %v1946, 2147483648
        %v1959 = vor.u32 1.1754944e-38, %v1958
        %v1960 = vsel %vm1957, %v1959, %v1955
        %v1961 = vmul.f32 1.0, %v1960
        %v1962 = vmul.f32 %v1941, %v1782
        %v1963 = vmul.f32 %v1941, %v1942
        %1965 = vrot.lane.b32.xlu0 %v1963, 64
        %v1966 = vpop.permute.xlu0 %1965
        %v1968 = vadd.f32 %v1962, %v1966
        %v1969 = vtanh.pop %v1968
        %v1970 = vmul.f32 %v1961, %v1969
        %v1971 = vld [vmem:[%s4] sm:$0xff]
        %v1972 = vld [vmem:[%s4 + $0x8] sm:$0xff]
        %v1973 = vld [vmem:[%s4 + $0x10] sm:$0xff]
        %v1974 = vld [vmem:[%s4 + $0x18] sm:$0xff]
        %v1975 = vld [vmem:[%s4 + $0x20] sm:$0xff]
        %v1976 = vld [vmem:[%s4 + $0x28] sm:$0xff]
        %v1977 = vld [vmem:[%s4 + $0x30] sm:$0xff]
        %v1978 = vld [vmem:[%s4 + $0x38] sm:$0xff]
        %v1979 = vld [vmem:[#allocation7] sm:$0x1]
        %v1981 = vperm.slane %v1979, 0
        %1984 = vrot.lane.b32.xlu0 %v1970, 64
        %v1985 = vpop.permute.xlu0 %1984
        %v1986 = vsel %vm478, %v1985, 0
        %1988 = vmatpush.msra.mxu0 0.0
        %1989 = vmatpush.msra.mxu0 0.0
        %1990 = vmatpush.msra.mxu0 0.0
        %1991 = vmatpush.msra.mxu0 0.0
        %1992 = vmatpush.msra.mxu0 0.0
        %1993 = vmatpush.msra.mxu0 0.0
        %1994 = vmatpush.msra.mxu0 0.0
        %1995 = vmatpush.msra.mxu0 0.0
        %1996 = vmatpush.msra.mxu0 %v1978
        %1997 = vmatpush.msra.mxu0 %v1977
        %1998 = vmatpush.msra.mxu0 %v1976
        %1999 = vmatpush.msra.mxu0 %v1975
        %2000 = vmatpush.msra.mxu0 %v1974
        %2001 = vmatpush.msra.mxu0 %v1973
        %2002 = vmatpush.msra.mxu0 %v1972
        %2003 = vmatpush.msra.mxu0 %v1971
        %2004 = vmatmul.f32.gmra.mxu0 %v1986
        %v2005 = vpop.f32.mrf.mxu0
        %v2006 = vadd.f32 %v1981, %v2005
        %2007 = vdwg.mxu0
        %v2008 = vmax.f32 %v2006, 0.0
        %v2009 = vld [vmem:[%s6] sm:$0xff]
        %v2010 = vld [vmem:[%s6 + $0x8] sm:$0xff]
        %v2011 = vld [vmem:[%s6 + $0x10] sm:$0xff]
        %v2012 = vld [vmem:[%s6 + $0x18] sm:$0xff]
        %v2013 = vld [vmem:[%s6 + $0x20] sm:$0xff]
        %v2014 = vld [vmem:[%s6 + $0x28] sm:$0xff]
        %v2015 = vld [vmem:[%s6 + $0x30] sm:$0xff]
        %v2016 = vld [vmem:[%s6 + $0x38] sm:$0xff]
        %v2017 = vld [vmem:[%s6 + $0x40] sm:$0xff]
        %v2018 = vld [vmem:[%s6 + $0x48] sm:$0xff]
        %v2019 = vld [vmem:[%s6 + $0x50] sm:$0xff]
        %v2020 = vld [vmem:[%s6 + $0x58] sm:$0xff]
        %v2021 = vld [vmem:[%s6 + $0x60] sm:$0xff]
        %v2022 = vld [vmem:[%s6 + $0x68] sm:$0xff]
        %v2023 = vld [vmem:[%s6 + $0x70] sm:$0xff]
        %v2024 = vld [vmem:[%s6 + $0x78] sm:$0xff]
        %v2025 = vld [vmem:[%s7] sm:$0x1]
        %v2027 = vperm.slane %v2025, 0
        %2029 = vmatpush.msra.mxu0 %v2024
        %2030 = vmatpush.msra.mxu0 %v2023
        %2031 = vmatpush.msra.mxu0 %v2022
        %2032 = vmatpush.msra.mxu0 %v2021
        %2033 = vmatpush.msra.mxu0 %v2020
        %2034 = vmatpush.msra.mxu0 %v2019
        %2035 = vmatpush.msra.mxu0 %v2018
        %2036 = vmatpush.msra.mxu0 %v2017
        %2037 = vmatpush.msra.mxu0 %v2016
        %2038 = vmatpush.msra.mxu0 %v2015
        %2039 = vmatpush.msra.mxu0 %v2014
        %2040 = vmatpush.msra.mxu0 %v2013
        %2041 = vmatpush.msra.mxu0 %v2012
        %2042 = vmatpush.msra.mxu0 %v2011
        %2043 = vmatpush.msra.mxu0 %v2010
        %2044 = vmatpush.msra.mxu0 %v2009
        %2045 = vmatmul.f32.gmra.mxu0 %v2008
        %v2046 = vpop.f32.mrf.mxu0
        %v2047 = vadd.f32 %v2027, %v2046
        %2048 = vdwg.mxu0
        %v2049 = vmax.f32 %v2047, 0.0
        %v2050 = vld [vmem:[#allocation8] sm:$0xff]
        %v2051 = vld [vmem:[#allocation8 + $0x8] sm:$0xff]
        %v2052 = vld [vmem:[#allocation8 + $0x10] sm:$0xff]
        %v2053 = vld [vmem:[#allocation8 + $0x18] sm:$0xff]
        %v2054 = vld [vmem:[#allocation8 + $0x20] sm:$0xff]
        %v2055 = vld [vmem:[#allocation8 + $0x28] sm:$0xff]
        %v2056 = vld [vmem:[#allocation8 + $0x30] sm:$0xff]
        %v2057 = vld [vmem:[#allocation8 + $0x38] sm:$0xff]
        %v2058 = vld [vmem:[%s9] sm:$0x1]
        %v2060 = vperm.slane %v2058, 0
        %v2063 = vsel %vm478, %v2049, 0
        %2065 = vmatpush.msra.mxu0 0.0
        %2066 = vmatpush.msra.mxu0 0.0
        %2067 = vmatpush.msra.mxu0 0.0
        %2068 = vmatpush.msra.mxu0 0.0
        %2069 = vmatpush.msra.mxu0 0.0
        %2070 = vmatpush.msra.mxu0 0.0
        %2071 = vmatpush.msra.mxu0 0.0
        %2072 = vmatpush.msra.mxu0 0.0
        %2073 = vmatpush.msra.mxu0 %v2057
        %2074 = vmatpush.msra.mxu0 %v2056
        %2075 = vmatpush.msra.mxu0 %v2055
        %2076 = vmatpush.msra.mxu0 %v2054
        %2077 = vmatpush.msra.mxu0 %v2053
        %2078 = vmatpush.msra.mxu0 %v2052
        %2079 = vmatpush.msra.mxu0 %v2051
        %2080 = vmatpush.msra.mxu0 %v2050
        %2081 = vmatmul.f32.gmra.mxu0 %v2063
        %v2082 = vpop.f32.mrf.mxu0
        %v2083 = vadd.f32 %v2060, %v2082
        %2084 = vdwg.mxu0
        %2085 = vst [vmem:[%s427] sm:$0xff] %v2083
        %s2086 = sand.u32 %s252, 1
        %s2087 = scalar_lea.sflag [#allocation4], %s2086
        %s2088 = sand.u32 %s252, 1
        %s2089 = smul.addr %s2088, 8
        %s2090 = scalar_lea.vmem [#allocation10], %s2089
        // Predicated region
        $region77: #{tpu_custom_call.1} parent=59 // pred_check
          %p2091 = pneg %p262
        $region78: #{tpu_custom_call.1} parent=59 // pred_check_branch
          %2093 = sbr.rel (%p2091) target = $region80
        $region79: #{tpu_custom_call.1} parent=59 // pred_region
          %2095 = vsyncadd %s2087, 0
          %s2096 = smul.addr %s29, 8
          %s2097 = scalar_lea.hbm %s10, %s2096
          %s2099 = sshll.u32 %s2090, 4
          %s2100 = int_to_ptr.vmem [resolvable:$true] %s2099
          %s2101 = sshll.u32 %s2097, 4
          %s2102 = int_to_ptr.hbm [resolvable:$true] %s2101
          %2104 = dma.vmem_to_hbm [thread:$0]  %s2100, 128, %s2102, %s2087
        $region80: #{tpu_custom_call.1} parent=59 // pred_fallthru
          _
      $region60: #{tpu_custom_call.1} parent=5 // pred_fallthru
        _
      %p2105 = scmp.le.s32.totalorder 2, %s24
      // Predicated region
      $region81: #{tpu_custom_call.1} parent=5 // pred_check
        %p2106 = pneg %p2105
      $region82: #{tpu_custom_call.1} parent=5 // pred_check_branch
        %2108 = sbr.rel (%p2106) target = $region84
      $region83: #{tpu_custom_call.1} parent=5 // pred_region
        %s2109 = ssub.s32 %s24, 2
        // Predicated region
        $region85: #{tpu_custom_call.1} parent=83 // pred_check
          %p2110 = pneg %p268
        $region86: #{tpu_custom_call.1} parent=83 // pred_check_branch
          %2112 = sbr.rel (%p2110) target = $region88
        $region87: #{tpu_custom_call.1} parent=83 // pred_region
          %s2113 = sand.u32 %s253, 1
          %s2114 = scalar_lea.sflag [#allocation4], %s2113
          %s2115 = sand.u32 %s253, 1
          %s2116 = smul.addr %s2115, 8
          %s2117 = scalar_lea.vmem [#allocation10], %s2116
          %2119 = dma.done %s2114, 128
        $region88: #{tpu_custom_call.1} parent=83 // pred_fallthru
          _
      $region84: #{tpu_custom_call.1} parent=5 // pred_fallthru
        _
    $region6: #{tpu_custom_call.1} parent=1 // loop_footer
      %s28 = sadd.s32 1, %s24
    $region7: #{tpu_custom_call.1} parent=1 // loop_footer_branch
      %23 = sbr.rel target = $region3
    $region8: #{tpu_custom_call.1} parent=1 // loop_exit
      _
    %2120 = vsyncpa [#allocation3], 1
    %s2121 = scalar_lea.sflag [#allocation3], 1
    %2122 = vsyncpa %s2121, 1
    %2123 = vsyncpa [#allocation6], 1
    %2124 = vsyncpa [#allocation9], 1
    %2125 = vsyncpa [#allocation4], 1
    %s2126 = scalar_lea.sflag [#allocation4], 1
    %2127 = vsyncpa %s2126, 1

</llo_original>
